<compile_context>
chip_gen: v6e
topology: v6e:2x2x1
jax: 0.10.0
libtpu: 0.0.40
codegen_flags: <defaults>
</compile_context>

<pallas_src>
import functools

import jax
import jax.numpy as jnp
from jax.experimental import pallas as pl
from jax.experimental.pallas import tpu as pltpu


# ----------------------------------------------------------------------------
# Fully fused 1x1-conv + training-mode BatchNorm kernel (no grid, VMEM resident).
#   x_ref:     (N, Cin, HW)   input activations (NCHW with HW flattened)
#   w_ref:     (Cout, Cin)    1x1 conv weight
#   gamma_ref: (Cout, 1)      BN weight
#   beta_ref:  (Cout, 1)      BN bias
#   o_ref:     (N, Cout, HW)  output; doubles as the VMEM-resident y buffer
# ----------------------------------------------------------------------------
def _fused_conv_bn_kernel(x_ref, w_ref, gamma_ref, beta_ref, o_ref, *, eps, n_imgs, hw):
    w = w_ref[...]
    cout = w.shape[0]
    inv_m = 1.0 / float(n_imgs * hw)

    # ---- Pass A: y = W @ x per image (MXU; K=Cin on lanes of W / sublanes of x,
    #      so no transpose is needed).  Keep y in the resident output block and
    #      accumulate per-output-channel sums (lane reduction -> (Cout, 1)).
    sum_y = jnp.zeros((cout, 1), jnp.float32)
    for n in range(n_imgs):
        y = jnp.dot(w, x_ref[n], preferred_element_type=jnp.float32)   # (Cout, HW)
        o_ref[n] = y
        sum_y = sum_y + jnp.sum(y, axis=1, keepdims=True)
    mean = sum_y * inv_m                                               # (Cout, 1)

    # ---- Pass B: centered second moment over the VMEM-resident y
    #      (avoids catastrophic cancellation of E[y^2] - E[y]^2).
    sum_sq = jnp.zeros((cout, 1), jnp.float32)
    for n in range(n_imgs):
        d = o_ref[n] - mean                                            # (Cout, HW)
        sum_sq = sum_sq + jnp.sum(d * d, axis=1, keepdims=True)
    var = sum_sq * inv_m                                               # biased variance

    inv_std = jax.lax.rsqrt(var + eps)                                 # EUP
    scale = gamma_ref[...] * inv_std                                   # (Cout, 1)
    shift = beta_ref[...] - mean * scale                               # (Cout, 1)

    # ---- Pass C: fused BN affine applied to the resident y; single HBM writeback.
    for n in range(n_imgs):
        o_ref[n] = o_ref[n] * scale + shift


@functools.partial(jax.jit, static_argnames=("eps",))
def conv1x1_batchnorm_forward(x_nchw, w_oihw, gamma, beta, *, eps=1e-5):
    N, Cin, H, W = x_nchw.shape
    Cout = w_oihw.shape[0]
    HW = H * W

    # NCHW stays NCHW: a 1x1 conv is (Cout,Cin)@(Cin,HW) per image.  Pure reshapes only
    # (no dtype cast, no transpose) so no extra HBM copies of x are materialized.
    x3d = x_nchw.reshape(N, Cin, HW)
    w2d = w_oihw.reshape(Cout, Cin)
    gamma2d = gamma.reshape(Cout, 1).astype(jnp.float32)
    beta2d = beta.reshape(Cout, 1).astype(jnp.float32)

    # Whole problem lives in VMEM (x + y + weights).  Real module size is ~4 MiB;
    # guard against shapes that would not fit a conservative budget (v7x: 64 MiB phys).
    x_bytes = x3d.dtype.itemsize * N * Cin * HW
    need_bytes = x_bytes + 4 * (N * Cout * HW + Cout * Cin + 4 * Cout * 128)
    if need_bytes > 48 * 1024 * 1024:
        raise ValueError("activation too large for the single fused VMEM-resident kernel")
    vmem_limit = int(min(max(2 * need_bytes, 32 * 1024 * 1024), 56 * 1024 * 1024))

    kernel = functools.partial(_fused_conv_bn_kernel, eps=float(eps), n_imgs=N, hw=HW)

    cost = pl.CostEstimate(
        flops=2 * N * Cout * Cin * HW + 6 * N * Cout * HW,
        transcendentals=Cout,
        bytes_accessed=x_bytes + 4 * (N * Cout * HW + Cout * Cin + 2 * Cout),
    )

    out3d = pl.pallas_call(
        kernel,
        out_shape=jax.ShapeDtypeStruct((N, Cout, HW), jnp.float32),
        in_specs=[
            pl.BlockSpec(memory_space=pltpu.MemorySpace.VMEM),   # x (whole array)
            pl.BlockSpec(memory_space=pltpu.MemorySpace.VMEM),   # W
            pl.BlockSpec(memory_space=pltpu.MemorySpace.VMEM),   # gamma
            pl.BlockSpec(memory_space=pltpu.MemorySpace.VMEM),   # beta
        ],
        out_specs=pl.BlockSpec(memory_space=pltpu.MemorySpace.VMEM),
        compiler_params=pltpu.CompilerParams(vmem_limit_bytes=vmem_limit),
        cost_estimate=cost,
    )(x3d, w2d, gamma2d, beta2d)

    return out3d.reshape(N, Cout, H, W)


def reference_forward(x_nchw, w_oihw, gamma, beta, eps=1e-5):
    # Pure-JAX reference: 1x1 conv + training-mode (biased) batchnorm.
    N, Cin, H, W = x_nchw.shape
    Cout = w_oihw.shape[0]
    y = jnp.einsum("nchw,oc->nohw", x_nchw, w_oihw.reshape(Cout, Cin),
                   precision=jax.lax.Precision.HIGHEST)
    mean = jnp.mean(y, axis=(0, 2, 3), keepdims=True)
    var = jnp.mean((y - mean) ** 2, axis=(0, 2, 3), keepdims=True)
    yhat = (y - mean) * jax.lax.rsqrt(var + eps)
    return yhat * gamma.reshape(1, Cout, 1, 1) + beta.reshape(1, Cout, 1, 1)


if __name__ == "__main__":
    # The module fixes Cin=64, Cout=256; use small spatial shapes (real module is 1x64x56x56).
    # H*W is deliberately NOT a multiple of 128 so lane-padding paths are exercised.
    Cin, Cout = 64, 256
    eps = 1e-5

    key = jax.random.PRNGKey(0)
    kx, kw, kg, kb = jax.random.split(key, 4)
    conv_w = jax.random.normal(kw, (Cout, Cin, 1, 1), dtype=jnp.float32) * 0.05
    gamma = 1.0 + 0.1 * jax.random.normal(kg, (Cout,), dtype=jnp.float32)
    beta = 0.1 * jax.random.normal(kb, (Cout,), dtype=jnp.float32)

    # Case 1: batch of 2, 14x14 spatial.
    x1 = jax.random.normal(kx, (2, Cin, 14, 14), dtype=jnp.float32)
    out1 = jax.block_until_ready(conv1x1_batchnorm_forward(x1, conv_w, gamma, beta, eps=eps))
    ref1 = reference_forward(x1, conv_w, gamma, beta, eps=eps)
    assert out1.shape == (2, Cout, 14, 14)
    assert jnp.allclose(out1, ref1, rtol=1e-3, atol=1e-3), "mismatch vs reference (N=2, 14x14)"

    # Case 2: single image, 28x28 spatial (closer to the real module's N=1 shape).
    x2 = jax.random.normal(kx, (1, Cin, 28, 28), dtype=jnp.float32)
    out2 = jax.block_until_ready(conv1x1_batchnorm_forward(x2, conv_w, gamma, beta, eps=eps))
    ref2 = reference_forward(x2, conv_w, gamma, beta, eps=eps)
    assert jnp.allclose(out2, ref2, rtol=1e-3, atol=1e-3), "mismatch vs reference (N=1, 28x28)"

    print("KERNEL_OK")
</pallas_src>

<mosaic_0001>
module attributes {stable_mosaic.version = 11 : i64} {
  func.func @_fused_conv_bn_kernel(%arg0: memref<2x64x196xf32, #tpu.memory_space<vmem>>, %arg1: memref<256x64xf32, #tpu.memory_space<vmem>>, %arg2: memref<256x1xf32, #tpu.memory_space<vmem>>, %arg3: memref<256x1xf32, #tpu.memory_space<vmem>>, %arg4: memref<2x256x196xf32, #tpu.memory_space<vmem>>) attributes {dimension_semantics = [], scalar_prefetch = 0 : i64, scratch_operands = 0 : i64, tpu.core_type = #tpu.core_type<tc>} {
    %c0 = arith.constant 0 : index
    %c0_0 = arith.constant 0 : index
    %0 = vector.load %arg1[%c0, %c0_0] : memref<256x64xf32, #tpu.memory_space<vmem>>, vector<256x64xf32>
    %cst = arith.constant 0.000000e+00 : f32
    %1 = vector.broadcast %cst : f32 to vector<256x1xf32>
    %c0_1 = arith.constant 0 : index
    %c0_2 = arith.constant 0 : index
    %c0_3 = arith.constant 0 : index
    %2 = vector.load %arg0[%c0_1, %c0_2, %c0_3] : memref<2x64x196xf32, #tpu.memory_space<vmem>>, vector<1x64x196xf32>
    %3 = vector.shape_cast %2 : vector<1x64x196xf32> to vector<64x196xf32>
    %cst_4 = arith.constant dense<0.000000e+00> : vector<256x196xf32>
    %4 = tpu.matmul %0, %3, %cst_4 {dimension_numbers = #tpu.dot_dimension_numbers<[1], [0], [0], [1], [0, 0, 1, 1], [], []>} : vector<256x64xf32>, vector<64x196xf32>, vector<256x196xf32> -> vector<256x196xf32>
    %c0_5 = arith.constant 0 : index
    %c0_6 = arith.constant 0 : index
    %c0_7 = arith.constant 0 : index
    %5 = vector.load %arg4[%c0_5, %c0_6, %c0_7] : memref<2x256x196xf32, #tpu.memory_space<vmem>>, vector<1x256x196xf32>
    %6 = vector.shape_cast %5 : vector<1x256x196xf32> to vector<256x196xf32>
    %7 = vector.shape_cast %4 : vector<256x196xf32> to vector<1x256x196xf32>
    tpu.vector_store %arg4[%c0_5, %c0_6, %c0_7], %7 {strides = array<i32>} : memref<2x256x196xf32, #tpu.memory_space<vmem>>, vector<1x256x196xf32>,
    %cst_8 = arith.constant dense<0.000000e+00> : vector<256xf32>
    %8 = vector.multi_reduction <add>, %4, %cst_8 [1] : vector<256x196xf32> to vector<256xf32>
    %9 = vector.shape_cast %8 : vector<256xf32> to vector<256x1xf32>
    %10 = arith.addf %1, %9 : vector<256x1xf32>
    %c1 = arith.constant 1 : index
    %c0_9 = arith.constant 0 : index
    %c0_10 = arith.constant 0 : index
    %11 = vector.load %arg0[%c1, %c0_9, %c0_10] : memref<2x64x196xf32, #tpu.memory_space<vmem>>, vector<1x64x196xf32>
    %12 = vector.shape_cast %11 : vector<1x64x196xf32> to vector<64x196xf32>
    %cst_11 = arith.constant dense<0.000000e+00> : vector<256x196xf32>
    %13 = tpu.matmul %0, %12, %cst_11 {dimension_numbers = #tpu.dot_dimension_numbers<[1], [0], [0], [1], [0, 0, 1, 1], [], []>} : vector<256x64xf32>, vector<64x196xf32>, vector<256x196xf32> -> vector<256x196xf32>
    %c1_12 = arith.constant 1 : index
    %c0_13 = arith.constant 0 : index
    %c0_14 = arith.constant 0 : index
    %14 = vector.load %arg4[%c1_12, %c0_13, %c0_14] : memref<2x256x196xf32, #tpu.memory_space<vmem>>, vector<1x256x196xf32>
    %15 = vector.shape_cast %14 : vector<1x256x196xf32> to vector<256x196xf32>
    %16 = vector.shape_cast %13 : vector<256x196xf32> to vector<1x256x196xf32>
    tpu.vector_store %arg4[%c1_12, %c0_13, %c0_14], %16 {strides = array<i32>} : memref<2x256x196xf32, #tpu.memory_space<vmem>>, vector<1x256x196xf32>,
    %cst_15 = arith.constant dense<0.000000e+00> : vector<256xf32>
    %17 = vector.multi_reduction <add>, %13, %cst_15 [1] : vector<256x196xf32> to vector<256xf32>
    %18 = vector.shape_cast %17 : vector<256xf32> to vector<256x1xf32>
    %19 = arith.addf %10, %18 : vector<256x1xf32>
    %cst_16 = arith.constant 0.00255102036 : f32
    %20 = vector.broadcast %cst_16 : f32 to vector<256x1xf32>
    %21 = arith.mulf %19, %20 : vector<256x1xf32>
    %cst_17 = arith.constant 0.000000e+00 : f32
    %22 = vector.broadcast %cst_17 : f32 to vector<256x1xf32>
    %c0_18 = arith.constant 0 : index
    %c0_19 = arith.constant 0 : index
    %c0_20 = arith.constant 0 : index
    %23 = vector.load %arg4[%c0_18, %c0_19, %c0_20] : memref<2x256x196xf32, #tpu.memory_space<vmem>>, vector<1x256x196xf32>
    %24 = vector.shape_cast %23 : vector<1x256x196xf32> to vector<256x196xf32>
    %25 = vector.broadcast %21 : vector<256x1xf32> to vector<256x196xf32>
    %26 = arith.subf %24, %25 : vector<256x196xf32>
    %27 = arith.mulf %26, %26 : vector<256x196xf32>
    %cst_21 = arith.constant dense<0.000000e+00> : vector<256xf32>
    %28 = vector.multi_reduction <add>, %27, %cst_21 [1] : vector<256x196xf32> to vector<256xf32>
    %29 = vector.shape_cast %28 : vector<256xf32> to vector<256x1xf32>
    %30 = arith.addf %22, %29 : vector<256x1xf32>
    %c1_22 = arith.constant 1 : index
    %c0_23 = arith.constant 0 : index
    %c0_24 = arith.constant 0 : index
    %31 = vector.load %arg4[%c1_22, %c0_23, %c0_24] : memref<2x256x196xf32, #tpu.memory_space<vmem>>, vector<1x256x196xf32>
    %32 = vector.shape_cast %31 : vector<1x256x196xf32> to vector<256x196xf32>
    %33 = vector.broadcast %21 : vector<256x1xf32> to vector<256x196xf32>
    %34 = arith.subf %32, %33 : vector<256x196xf32>
    %35 = arith.mulf %34, %34 : vector<256x196xf32>
    %cst_25 = arith.constant dense<0.000000e+00> : vector<256xf32>
    %36 = vector.multi_reduction <add>, %35, %cst_25 [1] : vector<256x196xf32> to vector<256xf32>
    %37 = vector.shape_cast %36 : vector<256xf32> to vector<256x1xf32>
    %38 = arith.addf %30, %37 : vector<256x1xf32>
    %cst_26 = arith.constant 0.00255102036 : f32
    %39 = vector.broadcast %cst_26 : f32 to vector<256x1xf32>
    %40 = arith.mulf %38, %39 : vector<256x1xf32>
    %cst_27 = arith.constant 9.99999974E-6 : f32
    %41 = vector.broadcast %cst_27 : f32 to vector<256x1xf32>
    %42 = arith.addf %40, %41 : vector<256x1xf32>
    %43 = math.rsqrt %42 : vector<256x1xf32>
    %c0_28 = arith.constant 0 : index
    %c0_29 = arith.constant 0 : index
    %44 = vector.load %arg2[%c0_28, %c0_29] : memref<256x1xf32, #tpu.memory_space<vmem>>, vector<256x1xf32>
    %45 = arith.mulf %44, %43 : vector<256x1xf32>
    %c0_30 = arith.constant 0 : index
    %c0_31 = arith.constant 0 : index
    %46 = vector.load %arg3[%c0_30, %c0_31] : memref<256x1xf32, #tpu.memory_space<vmem>>, vector<256x1xf32>
    %47 = arith.mulf %21, %45 : vector<256x1xf32>
    %48 = arith.subf %46, %47 : vector<256x1xf32>
    %c0_32 = arith.constant 0 : index
    %c0_33 = arith.constant 0 : index
    %c0_34 = arith.constant 0 : index
    %49 = vector.load %arg4[%c0_32, %c0_33, %c0_34] : memref<2x256x196xf32, #tpu.memory_space<vmem>>, vector<1x256x196xf32>
    %50 = vector.shape_cast %49 : vector<1x256x196xf32> to vector<256x196xf32>
    %51 = vector.broadcast %45 : vector<256x1xf32> to vector<256x196xf32>
    %52 = arith.mulf %50, %51 : vector<256x196xf32>
    %53 = vector.broadcast %48 : vector<256x1xf32> to vector<256x196xf32>
    %54 = arith.addf %52, %53 : vector<256x196xf32>
    %c0_35 = arith.constant 0 : index
    %c0_36 = arith.constant 0 : index
    %c0_37 = arith.constant 0 : index
    %55 = vector.load %arg4[%c0_35, %c0_36, %c0_37] : memref<2x256x196xf32, #tpu.memory_space<vmem>>, vector<1x256x196xf32>
    %56 = vector.shape_cast %55 : vector<1x256x196xf32> to vector<256x196xf32>
    %57 = vector.shape_cast %54 : vector<256x196xf32> to vector<1x256x196xf32>
    tpu.vector_store %arg4[%c0_35, %c0_36, %c0_37], %57 {strides = array<i32>} : memref<2x256x196xf32, #tpu.memory_space<vmem>>, vector<1x256x196xf32>,
    %c1_38 = arith.constant 1 : index
    %c0_39 = arith.constant 0 : index
    %c0_40 = arith.constant 0 : index
    %58 = vector.load %arg4[%c1_38, %c0_39, %c0_40] : memref<2x256x196xf32, #tpu.memory_space<vmem>>, vector<1x256x196xf32>
    %59 = vector.shape_cast %58 : vector<1x256x196xf32> to vector<256x196xf32>
    %60 = vector.broadcast %45 : vector<256x1xf32> to vector<256x196xf32>
    %61 = arith.mulf %59, %60 : vector<256x196xf32>
    %62 = vector.broadcast %48 : vector<256x1xf32> to vector<256x196xf32>
    %63 = arith.addf %61, %62 : vector<256x196xf32>
    %c1_41 = arith.constant 1 : index
    %c0_42 = arith.constant 0 : index
    %c0_43 = arith.constant 0 : index
    %64 = vector.load %arg4[%c1_41, %c0_42, %c0_43] : memref<2x256x196xf32, #tpu.memory_space<vmem>>, vector<1x256x196xf32>
    %65 = vector.shape_cast %64 : vector<1x256x196xf32> to vector<256x196xf32>
    %66 = vector.shape_cast %63 : vector<256x196xf32> to vector<1x256x196xf32>
    tpu.vector_store %arg4[%c1_41, %c0_42, %c0_43], %66 {strides = array<i32>} : memref<2x256x196xf32, #tpu.memory_space<vmem>>, vector<1x256x196xf32>,
    return
  }
}

</mosaic_0001>

<llo_original>
// kernel: conv1x1_batchnorm_forward.1
$region0: #{conv1x1_batchnorm_forward.1}
  #allocation0 [shape = 'u32[]', space=smem, size = 0x4, offset = 0x4, fixed_abs, tag = 'smem constant byte address 0x4 - core index']
  #allocation1 [shape = 'u32[144,128]{1,0:T(1,128)}', space=vmem, size = 0x12000, scoped, tag = 'internal scratch']
  %s0 = inlined_call_operand.vmem [shape: f32[2,64,196], index: 0, kind: input, shape index: {}]
  %s1 = inlined_call_operand.vmem [shape: f32[256,64], index: 1, kind: input, shape index: {}]
  %s2 = inlined_call_operand.vmem [shape: f32[256,1], index: 2, kind: input, shape index: {}]
  %s3 = inlined_call_operand.vmem [shape: f32[256,1], index: 3, kind: input, shape index: {}]
  %s4 = inlined_call_operand.vmem [shape: f32[2,256,196], index: 4, kind: output, shape index: {}]
  %s5 = sld [smem:[#allocation0]]
  $region26: #{conv1x1_batchnorm_forward.1} parent=0
    _
  %s7 = ssub.s32 1, %s5
  %s8 = scalar_select 0, %s7, %s5
  // Predicated region
  $region2: #{conv1x1_batchnorm_forward.1} parent=0 // pred_check
    _
  $region3: #{conv1x1_batchnorm_forward.1} parent=0 // pred_check_branch
    %10 = sbr.rel (0) target = $region5
  $region4: #{conv1x1_batchnorm_forward.1} parent=0 // pred_region
    _
  $region5: #{conv1x1_batchnorm_forward.1} parent=0 // pred_fallthru
    _
  // Predicated region
  $region6: #{conv1x1_batchnorm_forward.1} parent=0 // pred_check
    _
  $region7: #{conv1x1_batchnorm_forward.1} parent=0 // pred_check_branch
    %12 = sbr.rel (0) target = $region9
  $region8: #{conv1x1_batchnorm_forward.1} parent=0 // pred_region
    _
  $region9: #{conv1x1_batchnorm_forward.1} parent=0 // pred_fallthru
    _
  // Predicated region
  $region10: #{conv1x1_batchnorm_forward.1} parent=0 // pred_check
    _
  $region11: #{conv1x1_batchnorm_forward.1} parent=0 // pred_check_branch
    %14 = sbr.rel (0) target = $region13
  $region12: #{conv1x1_batchnorm_forward.1} parent=0 // pred_region
    _
  $region13: #{conv1x1_batchnorm_forward.1} parent=0 // pred_fallthru
    _
  // Predicated region
  $region14: #{conv1x1_batchnorm_forward.1} parent=0 // pred_check
    _
  $region15: #{conv1x1_batchnorm_forward.1} parent=0 // pred_check_branch
    %16 = sbr.rel (0) target = $region17
  $region16: #{conv1x1_batchnorm_forward.1} parent=0 // pred_region
    _
  $region17: #{conv1x1_batchnorm_forward.1} parent=0 // pred_fallthru
    _
  %v17 = vld [vmem:[%s1] sm:$0xff]
  %v18 = vld [vmem:[%s1 + $0x8] sm:$0xff]
  %v19 = vld [vmem:[%s1 + $0x10] sm:$0xff]
  %v20 = vld [vmem:[%s1 + $0x18] sm:$0xff]
  %v21 = vld [vmem:[%s1 + $0x20] sm:$0xff]
  %v22 = vld [vmem:[%s1 + $0x28] sm:$0xff]
  %v23 = vld [vmem:[%s1 + $0x30] sm:$0xff]
  %v24 = vld [vmem:[%s1 + $0x38] sm:$0xff]
  %v25 = vld [vmem:[%s1 + $0x40] sm:$0xff]
  %v26 = vld [vmem:[%s1 + $0x48] sm:$0xff]
  %v27 = vld [vmem:[%s1 + $0x50] sm:$0xff]
  %v28 = vld [vmem:[%s1 + $0x58] sm:$0xff]
  %v29 = vld [vmem:[%s1 + $0x60] sm:$0xff]
  %v30 = vld [vmem:[%s1 + $0x68] sm:$0xff]
  %v31 = vld [vmem:[%s1 + $0x70] sm:$0xff]
  %v32 = vld [vmem:[%s1 + $0x78] sm:$0xff]
  %v33 = vld [vmem:[%s1 + $0x80] sm:$0xff]
  %v34 = vld [vmem:[%s1 + $0x88] sm:$0xff]
  %v35 = vld [vmem:[%s1 + $0x90] sm:$0xff]
  %v36 = vld [vmem:[%s1 + $0x98] sm:$0xff]
  %v37 = vld [vmem:[%s1 + $0xa0] sm:$0xff]
  %v38 = vld [vmem:[%s1 + $0xa8] sm:$0xff]
  %v39 = vld [vmem:[%s1 + $0xb0] sm:$0xff]
  %v40 = vld [vmem:[%s1 + $0xb8] sm:$0xff]
  %v41 = vld [vmem:[%s1 + $0xc0] sm:$0xff]
  %v42 = vld [vmem:[%s1 + $0xc8] sm:$0xff]
  %v43 = vld [vmem:[%s1 + $0xd0] sm:$0xff]
  %v44 = vld [vmem:[%s1 + $0xd8] sm:$0xff]
  %v45 = vld [vmem:[%s1 + $0xe0] sm:$0xff]
  %v46 = vld [vmem:[%s1 + $0xe8] sm:$0xff]
  %v47 = vld [vmem:[%s1 + $0xf0] sm:$0xff]
  %v48 = vld [vmem:[%s1 + $0xf8] sm:$0xff]
  %v49 = vld [vmem:[%s0] sm:$0xff]
  %v50 = vld [vmem:[%s0 + $0x8] sm:$0xff]
  %v51 = vld [vmem:[%s0 + $0x10] sm:$0xff]
  %v52 = vld [vmem:[%s0 + $0x18] sm:$0xff]
  %v53 = vld [vmem:[%s0 + $0x20] sm:$0xff]
  %v54 = vld [vmem:[%s0 + $0x28] sm:$0xff]
  %v55 = vld [vmem:[%s0 + $0x30] sm:$0xff]
  %v56 = vld [vmem:[%s0 + $0x38] sm:$0xff]
  %v57 = vld [vmem:[%s0 + $0x40] sm:$0xff]
  %v58 = vld [vmem:[%s0 + $0x48] sm:$0xff]
  %v59 = vld [vmem:[%s0 + $0x50] sm:$0xff]
  %v60 = vld [vmem:[%s0 + $0x58] sm:$0xff]
  %v61 = vld [vmem:[%s0 + $0x60] sm:$0xff]
  %v62 = vld [vmem:[%s0 + $0x68] sm:$0xff]
  %v63 = vld [vmem:[%s0 + $0x70] sm:$0xff]
  %v64 = vld [vmem:[%s0 + $0x78] sm:$0xff]
  %vm65 = vcmask 523264
  %v67 = vsel %vm65, %v17, 0
  %v70 = vsel %vm65, %v18, 0
  %v73 = vsel %vm65, %v19, 0
  %v76 = vsel %vm65, %v20, 0
  %v79 = vsel %vm65, %v21, 0
  %v82 = vsel %vm65, %v22, 0
  %v85 = vsel %vm65, %v23, 0
  %v88 = vsel %vm65, %v24, 0
  %v91 = vsel %vm65, %v25, 0
  %v94 = vsel %vm65, %v26, 0
  %v97 = vsel %vm65, %v27, 0
  %v100 = vsel %vm65, %v28, 0
  %v103 = vsel %vm65, %v29, 0
  %v106 = vsel %vm65, %v30, 0
  %v109 = vsel %vm65, %v31, 0
  %v112 = vsel %vm65, %v32, 0
  %v115 = vsel %vm65, %v33, 0
  %v118 = vsel %vm65, %v34, 0
  %v121 = vsel %vm65, %v35, 0
  %v124 = vsel %vm65, %v36, 0
  %v127 = vsel %vm65, %v37, 0
  %v130 = vsel %vm65, %v38, 0
  %v133 = vsel %vm65, %v39, 0
  %v136 = vsel %vm65, %v40, 0
  %v139 = vsel %vm65, %v41, 0
  %v142 = vsel %vm65, %v42, 0
  %v145 = vsel %vm65, %v43, 0
  %v148 = vsel %vm65, %v44, 0
  %v151 = vsel %vm65, %v45, 0
  %v154 = vsel %vm65, %v46, 0
  %v157 = vsel %vm65, %v47, 0
  %v160 = vsel %vm65, %v48, 0
  %162 = vmatprep.subr.mxu0 0.0
  %163 = vmatpush1.msra.mxu0 0.0
  %164 = vmatprep.subr.mxu0 0.0
  %165 = vmatpush1.msra.mxu0 0.0
  %166 = vmatprep.subr.mxu0 0.0
  %167 = vmatpush1.msra.mxu0 0.0
  %168 = vmatprep.subr.mxu0 0.0
  %169 = vmatpush1.msra.mxu0 0.0
  %170 = vmatprep.subr.mxu0 0.0
  %171 = vmatpush1.msra.mxu0 0.0
  %172 = vmatprep.subr.mxu0 0.0
  %173 = vmatpush1.msra.mxu0 0.0
  %174 = vmatprep.subr.mxu0 0.0
  %175 = vmatpush1.msra.mxu0 0.0
  %176 = vmatprep.subr.mxu0 0.0
  %177 = vmatpush1.msra.mxu0 0.0
  %178 = vmatprep.subr.mxu0 %v64
  %179 = vmatpush1.msra.mxu0 %v63
  %180 = vmatprep.subr.mxu0 %v62
  %181 = vmatpush1.msra.mxu0 %v61
  %182 = vmatprep.subr.mxu0 %v60
  %183 = vmatpush1.msra.mxu0 %v59
  %184 = vmatprep.subr.mxu0 %v58
  %185 = vmatpush1.msra.mxu0 %v57
  %186 = vmatprep.subr.mxu0 %v56
  %187 = vmatpush1.msra.mxu0 %v55
  %188 = vmatprep.subr.mxu0 %v54
  %189 = vmatpush1.msra.mxu0 %v53
  %190 = vmatprep.subr.mxu0 %v52
  %191 = vmatpush1.msra.mxu0 %v51
  %192 = vmatprep.subr.mxu0 %v50
  %193 = vmatpush1.msra.mxu0 %v49
  %194 = vmatprep.subr.mxu0 0.0
  %195 = vmatpush2.msra.mxu0 0.0
  %196 = vmatprep.subr.mxu0 0.0
  %197 = vmatpush2.msra.mxu0 0.0
  %198 = vmatprep.subr.mxu0 0.0
  %199 = vmatpush2.msra.mxu0 0.0
  %200 = vmatprep.subr.mxu0 0.0
  %201 = vmatpush2.msra.mxu0 0.0
  %202 = vmatprep.subr.mxu0 0.0
  %203 = vmatpush2.msra.mxu0 0.0
  %204 = vmatprep.subr.mxu0 0.0
  %205 = vmatpush2.msra.mxu0 0.0
  %206 = vmatprep.subr.mxu0 0.0
  %207 = vmatpush2.msra.mxu0 0.0
  %208 = vmatprep.subr.mxu0 0.0
  %209 = vmatpush2.msra.mxu0 0.0
  %210 = vmatprep.subr.mxu0 0.0
  %211 = vmatpush2.msra.mxu0 0.0
  %212 = vmatprep.subr.mxu0 0.0
  %213 = vmatpush2.msra.mxu0 0.0
  %214 = vmatprep.subr.mxu0 0.0
  %215 = vmatpush2.msra.mxu0 0.0
  %216 = vmatprep.subr.mxu0 0.0
  %217 = vmatpush2.msra.mxu0 0.0
  %218 = vmatprep.subr.mxu0 0.0
  %219 = vmatpush2.msra.mxu0 0.0
  %220 = vmatprep.subr.mxu0 0.0
  %221 = vmatpush2.msra.mxu0 0.0
  %222 = vmatprep.subr.mxu0 0.0
  %223 = vmatpush2.msra.mxu0 0.0
  %224 = vmatprep.subr.mxu0 0.0
  %225 = vmatpush2.msra.mxu0 0.0
  %226 = vmatprep.mubr.f32.mxu0 0.0
  %227 = vmatmul.mubr.f32.gmra.mxu0 %v67
  %v228 = vpop.f32.mrf.mxu0
  %v229 = vadd.f32 0.0, %v228
  %v230 = vpop.f32.mrf.mxu0
  %v231 = vadd.f32 0.0, %v230
  %232 = vmatprep.mubr.f32.mxu0 0.0
  %233 = vmatmul.mubr.f32.gmra.mxu0 %v70
  %v234 = vpop.f32.mrf.mxu0
  %v235 = vadd.f32 0.0, %v234
  %v236 = vpop.f32.mrf.mxu0
  %v237 = vadd.f32 0.0, %v236
  %238 = vmatprep.mubr.f32.mxu0 0.0
  %239 = vmatmul.mubr.f32.gmra.mxu0 %v73
  %v240 = vpop.f32.mrf.mxu0
  %v241 = vadd.f32 0.0, %v240
  %v242 = vpop.f32.mrf.mxu0
  %v243 = vadd.f32 0.0, %v242
  %244 = vmatprep.mubr.f32.mxu0 0.0
  %245 = vmatmul.mubr.f32.gmra.mxu0 %v76
  %v246 = vpop.f32.mrf.mxu0
  %v247 = vadd.f32 0.0, %v246
  %v248 = vpop.f32.mrf.mxu0
  %v249 = vadd.f32 0.0, %v248
  %250 = vmatprep.mubr.f32.mxu0 0.0
  %251 = vmatmul.mubr.f32.gmra.mxu0 %v79
  %v252 = vpop.f32.mrf.mxu0
  %v253 = vadd.f32 0.0, %v252
  %v254 = vpop.f32.mrf.mxu0
  %v255 = vadd.f32 0.0, %v254
  %256 = vmatprep.mubr.f32.mxu0 0.0
  %257 = vmatmul.mubr.f32.gmra.mxu0 %v82
  %v258 = vpop.f32.mrf.mxu0
  %v259 = vadd.f32 0.0, %v258
  %v260 = vpop.f32.mrf.mxu0
  %v261 = vadd.f32 0.0, %v260
  %262 = vmatprep.mubr.f32.mxu0 0.0
  %263 = vmatmul.mubr.f32.gmra.mxu0 %v85
  %v264 = vpop.f32.mrf.mxu0
  %v265 = vadd.f32 0.0, %v264
  %v266 = vpop.f32.mrf.mxu0
  %v267 = vadd.f32 0.0, %v266
  %268 = vmatprep.mubr.f32.mxu0 0.0
  %269 = vmatmul.mubr.f32.gmra.mxu0 %v88
  %v270 = vpop.f32.mrf.mxu0
  %v271 = vadd.f32 0.0, %v270
  %v272 = vpop.f32.mrf.mxu0
  %v273 = vadd.f32 0.0, %v272
  %274 = vmatprep.mubr.f32.mxu0 0.0
  %275 = vmatmul.mubr.f32.gmra.mxu0 %v91
  %v276 = vpop.f32.mrf.mxu0
  %v277 = vadd.f32 0.0, %v276
  %v278 = vpop.f32.mrf.mxu0
  %v279 = vadd.f32 0.0, %v278
  %280 = vmatprep.mubr.f32.mxu0 0.0
  %281 = vmatmul.mubr.f32.gmra.mxu0 %v94
  %v282 = vpop.f32.mrf.mxu0
  %v283 = vadd.f32 0.0, %v282
  %v284 = vpop.f32.mrf.mxu0
  %v285 = vadd.f32 0.0, %v284
  %286 = vmatprep.mubr.f32.mxu0 0.0
  %287 = vmatmul.mubr.f32.gmra.mxu0 %v97
  %v288 = vpop.f32.mrf.mxu0
  %v289 = vadd.f32 0.0, %v288
  %v290 = vpop.f32.mrf.mxu0
  %v291 = vadd.f32 0.0, %v290
  %292 = vmatprep.mubr.f32.mxu0 0.0
  %293 = vmatmul.mubr.f32.gmra.mxu0 %v100
  %v294 = vpop.f32.mrf.mxu0
  %v295 = vadd.f32 0.0, %v294
  %v296 = vpop.f32.mrf.mxu0
  %v297 = vadd.f32 0.0, %v296
  %298 = vmatprep.mubr.f32.mxu0 0.0
  %299 = vmatmul.mubr.f32.gmra.mxu0 %v103
  %v300 = vpop.f32.mrf.mxu0
  %v301 = vadd.f32 0.0, %v300
  %v302 = vpop.f32.mrf.mxu0
  %v303 = vadd.f32 0.0, %v302
  %304 = vmatprep.mubr.f32.mxu0 0.0
  %305 = vmatmul.mubr.f32.gmra.mxu0 %v106
  %v306 = vpop.f32.mrf.mxu0
  %v307 = vadd.f32 0.0, %v306
  %v308 = vpop.f32.mrf.mxu0
  %v309 = vadd.f32 0.0, %v308
  %310 = vmatprep.mubr.f32.mxu0 0.0
  %311 = vmatmul.mubr.f32.gmra.mxu0 %v109
  %v312 = vpop.f32.mrf.mxu0
  %v313 = vadd.f32 0.0, %v312
  %v314 = vpop.f32.mrf.mxu0
  %v315 = vadd.f32 0.0, %v314
  %316 = vmatprep.mubr.f32.mxu0 0.0
  %317 = vmatmul.mubr.f32.gmra.mxu0 %v112
  %v318 = vpop.f32.mrf.mxu0
  %v319 = vadd.f32 0.0, %v318
  %v320 = vpop.f32.mrf.mxu0
  %v321 = vadd.f32 0.0, %v320
  %322 = vmatprep.mubr.f32.mxu0 0.0
  %323 = vmatmul.mubr.f32.gmra.mxu0 %v115
  %v324 = vpop.f32.mrf.mxu0
  %v325 = vadd.f32 0.0, %v324
  %v326 = vpop.f32.mrf.mxu0
  %v327 = vadd.f32 0.0, %v326
  %328 = vmatprep.mubr.f32.mxu0 0.0
  %329 = vmatmul.mubr.f32.gmra.mxu0 %v118
  %v330 = vpop.f32.mrf.mxu0
  %v331 = vadd.f32 0.0, %v330
  %v332 = vpop.f32.mrf.mxu0
  %v333 = vadd.f32 0.0, %v332
  %334 = vmatprep.mubr.f32.mxu0 0.0
  %335 = vmatmul.mubr.f32.gmra.mxu0 %v121
  %v336 = vpop.f32.mrf.mxu0
  %v337 = vadd.f32 0.0, %v336
  %v338 = vpop.f32.mrf.mxu0
  %v339 = vadd.f32 0.0, %v338
  %340 = vmatprep.mubr.f32.mxu0 0.0
  %341 = vmatmul.mubr.f32.gmra.mxu0 %v124
  %v342 = vpop.f32.mrf.mxu0
  %v343 = vadd.f32 0.0, %v342
  %v344 = vpop.f32.mrf.mxu0
  %v345 = vadd.f32 0.0, %v344
  %346 = vmatprep.mubr.f32.mxu0 0.0
  %347 = vmatmul.mubr.f32.gmra.mxu0 %v127
  %v348 = vpop.f32.mrf.mxu0
  %v349 = vadd.f32 0.0, %v348
  %v350 = vpop.f32.mrf.mxu0
  %v351 = vadd.f32 0.0, %v350
  %352 = vmatprep.mubr.f32.mxu0 0.0
  %353 = vmatmul.mubr.f32.gmra.mxu0 %v130
  %v354 = vpop.f32.mrf.mxu0
  %v355 = vadd.f32 0.0, %v354
  %v356 = vpop.f32.mrf.mxu0
  %v357 = vadd.f32 0.0, %v356
  %358 = vmatprep.mubr.f32.mxu0 0.0
  %359 = vmatmul.mubr.f32.gmra.mxu0 %v133
  %v360 = vpop.f32.mrf.mxu0
  %v361 = vadd.f32 0.0, %v360
  %v362 = vpop.f32.mrf.mxu0
  %v363 = vadd.f32 0.0, %v362
  %364 = vmatprep.mubr.f32.mxu0 0.0
  %365 = vmatmul.mubr.f32.gmra.mxu0 %v136
  %v366 = vpop.f32.mrf.mxu0
  %v367 = vadd.f32 0.0, %v366
  %v368 = vpop.f32.mrf.mxu0
  %v369 = vadd.f32 0.0, %v368
  %370 = vmatprep.mubr.f32.mxu0 0.0
  %371 = vmatmul.mubr.f32.gmra.mxu0 %v139
  %v372 = vpop.f32.mrf.mxu0
  %v373 = vadd.f32 0.0, %v372
  %v374 = vpop.f32.mrf.mxu0
  %v375 = vadd.f32 0.0, %v374
  %376 = vmatprep.mubr.f32.mxu0 0.0
  %377 = vmatmul.mubr.f32.gmra.mxu0 %v142
  %v378 = vpop.f32.mrf.mxu0
  %v379 = vadd.f32 0.0, %v378
  %v380 = vpop.f32.mrf.mxu0
  %v381 = vadd.f32 0.0, %v380
  %382 = vmatprep.mubr.f32.mxu0 0.0
  %383 = vmatmul.mubr.f32.gmra.mxu0 %v145
  %v384 = vpop.f32.mrf.mxu0
  %v385 = vadd.f32 0.0, %v384
  %v386 = vpop.f32.mrf.mxu0
  %v387 = vadd.f32 0.0, %v386
  %388 = vmatprep.mubr.f32.mxu0 0.0
  %389 = vmatmul.mubr.f32.gmra.mxu0 %v148
  %v390 = vpop.f32.mrf.mxu0
  %v391 = vadd.f32 0.0, %v390
  %v392 = vpop.f32.mrf.mxu0
  %v393 = vadd.f32 0.0, %v392
  %394 = vmatprep.mubr.f32.mxu0 0.0
  %395 = vmatmul.mubr.f32.gmra.mxu0 %v151
  %v396 = vpop.f32.mrf.mxu0
  %v397 = vadd.f32 0.0, %v396
  %v398 = vpop.f32.mrf.mxu0
  %v399 = vadd.f32 0.0, %v398
  %400 = vmatprep.mubr.f32.mxu0 0.0
  %401 = vmatmul.mubr.f32.gmra.mxu0 %v154
  %v402 = vpop.f32.mrf.mxu0
  %v403 = vadd.f32 0.0, %v402
  %v404 = vpop.f32.mrf.mxu0
  %v405 = vadd.f32 0.0, %v404
  %406 = vmatprep.mubr.f32.mxu0 0.0
  %407 = vmatmul.mubr.f32.gmra.mxu0 %v157
  %v408 = vpop.f32.mrf.mxu0
  %v409 = vadd.f32 0.0, %v408
  %v410 = vpop.f32.mrf.mxu0
  %v411 = vadd.f32 0.0, %v410
  %412 = vmatprep.mubr.f32.mxu0 0.0
  %413 = vmatmul.mubr.f32.gmra.mxu0 %v160
  %v414 = vpop.f32.mrf.mxu0
  %v415 = vadd.f32 0.0, %v414
  %v416 = vpop.f32.mrf.mxu0
  %v417 = vadd.f32 0.0, %v416
  %418 = vdwg.mxu0
  %419 = vst [vmem:[%s4] sm:$0xff] %v229
  %vm420 = vcmask 556032
  %421 = vst.msk [vmem:[%s4 + $0x8] sm:$0xff] %vm420, %v231
  %422 = vst [vmem:[%s4 + $0x10] sm:$0xff] %v235
  %423 = vst.msk [vmem:[%s4 + $0x18] sm:$0xff] %vm420, %v237
  %424 = vst [vmem:[%s4 + $0x20] sm:$0xff] %v241
  %425 = vst.msk [vmem:[%s4 + $0x28] sm:$0xff] %vm420, %v243
  %426 = vst [vmem:[%s4 + $0x30] sm:$0xff] %v247
  %427 = vst.msk [vmem:[%s4 + $0x38] sm:$0xff] %vm420, %v249
  %428 = vst [vmem:[%s4 + $0x40] sm:$0xff] %v253
  %429 = vst.msk [vmem:[%s4 + $0x48] sm:$0xff] %vm420, %v255
  %430 = vst [vmem:[%s4 + $0x50] sm:$0xff] %v259
  %431 = vst.msk [vmem:[%s4 + $0x58] sm:$0xff] %vm420, %v261
  %432 = vst [vmem:[%s4 + $0x60] sm:$0xff] %v265
  %433 = vst.msk [vmem:[%s4 + $0x68] sm:$0xff] %vm420, %v267
  %434 = vst [vmem:[%s4 + $0x70] sm:$0xff] %v271
  %435 = vst.msk [vmem:[%s4 + $0x78] sm:$0xff] %vm420, %v273
  %436 = vst [vmem:[%s4 + $0x80] sm:$0xff] %v277
  %437 = vst.msk [vmem:[%s4 + $0x88] sm:$0xff] %vm420, %v279
  %438 = vst [vmem:[%s4 + $0x90] sm:$0xff] %v283
  %439 = vst.msk [vmem:[%s4 + $0x98] sm:$0xff] %vm420, %v285
  %440 = vst [vmem:[%s4 + $0xa0] sm:$0xff] %v289
  %441 = vst.msk [vmem:[%s4 + $0xa8] sm:$0xff] %vm420, %v291
  %442 = vst [vmem:[%s4 + $0xb0] sm:$0xff] %v295
  %443 = vst.msk [vmem:[%s4 + $0xb8] sm:$0xff] %vm420, %v297
  %444 = vst [vmem:[%s4 + $0xc0] sm:$0xff] %v301
  %445 = vst.msk [vmem:[%s4 + $0xc8] sm:$0xff] %vm420, %v303
  %446 = vst [vmem:[%s4 + $0xd0] sm:$0xff] %v307
  %447 = vst.msk [vmem:[%s4 + $0xd8] sm:$0xff] %vm420, %v309
  %448 = vst [vmem:[%s4 + $0xe0] sm:$0xff] %v313
  %449 = vst.msk [vmem:[%s4 + $0xe8] sm:$0xff] %vm420, %v315
  %450 = vst [vmem:[%s4 + $0xf0] sm:$0xff] %v319
  %451 = vst.msk [vmem:[%s4 + $0xf8] sm:$0xff] %vm420, %v321
  %452 = vst [vmem:[%s4 + $0x100] sm:$0xff] %v325
  %453 = vst.msk [vmem:[%s4 + $0x108] sm:$0xff] %vm420, %v327
  %454 = vst [vmem:[%s4 + $0x110] sm:$0xff] %v331
  %455 = vst.msk [vmem:[%s4 + $0x118] sm:$0xff] %vm420, %v333
  %456 = vst [vmem:[%s4 + $0x120] sm:$0xff] %v337
  %457 = vst.msk [vmem:[%s4 + $0x128] sm:$0xff] %vm420, %v339
  %458 = vst [vmem:[%s4 + $0x130] sm:$0xff] %v343
  %459 = vst.msk [vmem:[%s4 + $0x138] sm:$0xff] %vm420, %v345
  %460 = vst [vmem:[%s4 + $0x140] sm:$0xff] %v349
  %461 = vst.msk [vmem:[%s4 + $0x148] sm:$0xff] %vm420, %v351
  %462 = vst [vmem:[%s4 + $0x150] sm:$0xff] %v355
  %463 = vst.msk [vmem:[%s4 + $0x158] sm:$0xff] %vm420, %v357
  %464 = vst [vmem:[%s4 + $0x160] sm:$0xff] %v361
  %465 = vst.msk [vmem:[%s4 + $0x168] sm:$0xff] %vm420, %v363
  %466 = vst [vmem:[%s4 + $0x170] sm:$0xff] %v367
  %467 = vst.msk [vmem:[%s4 + $0x178] sm:$0xff] %vm420, %v369
  %468 = vst [vmem:[%s4 + $0x180] sm:$0xff] %v373
  %469 = vst.msk [vmem:[%s4 + $0x188] sm:$0xff] %vm420, %v375
  %470 = vst [vmem:[%s4 + $0x190] sm:$0xff] %v379
  %471 = vst.msk [vmem:[%s4 + $0x198] sm:$0xff] %vm420, %v381
  %472 = vst [vmem:[%s4 + $0x1a0] sm:$0xff] %v385
  %473 = vst.msk [vmem:[%s4 + $0x1a8] sm:$0xff] %vm420, %v387
  %474 = vst [vmem:[%s4 + $0x1b0] sm:$0xff] %v391
  %475 = vst.msk [vmem:[%s4 + $0x1b8] sm:$0xff] %vm420, %v393
  %476 = vst [vmem:[%s4 + $0x1c0] sm:$0xff] %v397
  %477 = vst.msk [vmem:[%s4 + $0x1c8] sm:$0xff] %vm420, %v399
  %478 = vst [vmem:[%s4 + $0x1d0] sm:$0xff] %v403
  %479 = vst.msk [vmem:[%s4 + $0x1d8] sm:$0xff] %vm420, %v405
  %480 = vst [vmem:[%s4 + $0x1e0] sm:$0xff] %v409
  %481 = vst.msk [vmem:[%s4 + $0x1e8] sm:$0xff] %vm420, %v411
  %482 = vst [vmem:[%s4 + $0x1f0] sm:$0xff] %v415
  %483 = vst.msk [vmem:[%s4 + $0x1f8] sm:$0xff] %vm420, %v417
  %v484 = vsel %vm420, %v231, 0.0
  %v485 = vadd.f32 %v229, %v484
  %486 = vadd.xlane.f32.xlu0 %v485
  %v487 = vpop.xlane.xlu0 %486
  %v488 = vsel %vm420, %v237, 0.0
  %v489 = vadd.f32 %v235, %v488
  %490 = vadd.xlane.f32.xlu0 %v489
  %v491 = vpop.xlane.xlu0 %490
  %v492 = vsel %vm420, %v243, 0.0
  %v493 = vadd.f32 %v241, %v492
  %494 = vadd.xlane.f32.xlu0 %v493
  %v495 = vpop.xlane.xlu0 %494
  %v496 = vsel %vm420, %v249, 0.0
  %v497 = vadd.f32 %v247, %v496
  %498 = vadd.xlane.f32.xlu0 %v497
  %v499 = vpop.xlane.xlu0 %498
  %v500 = vsel %vm420, %v255, 0.0
  %v501 = vadd.f32 %v253, %v500
  %502 = vadd.xlane.f32.xlu0 %v501
  %v503 = vpop.xlane.xlu0 %502
  %v504 = vsel %vm420, %v261, 0.0
  %v505 = vadd.f32 %v259, %v504
  %506 = vadd.xlane.f32.xlu0 %v505
  %v507 = vpop.xlane.xlu0 %506
  %v508 = vsel %vm420, %v267, 0.0
  %v509 = vadd.f32 %v265, %v508
  %510 = vadd.xlane.f32.xlu0 %v509
  %v511 = vpop.xlane.xlu0 %510
  %v512 = vsel %vm420, %v273, 0.0
  %v513 = vadd.f32 %v271, %v512
  %514 = vadd.xlane.f32.xlu0 %v513
  %v515 = vpop.xlane.xlu0 %514
  %v516 = vsel %vm420, %v279, 0.0
  %v517 = vadd.f32 %v277, %v516
  %518 = vadd.xlane.f32.xlu0 %v517
  %v519 = vpop.xlane.xlu0 %518
  %v520 = vsel %vm420, %v285, 0.0
  %v521 = vadd.f32 %v283, %v520
  %522 = vadd.xlane.f32.xlu0 %v521
  %v523 = vpop.xlane.xlu0 %522
  %v524 = vsel %vm420, %v291, 0.0
  %v525 = vadd.f32 %v289, %v524
  %526 = vadd.xlane.f32.xlu0 %v525
  %v527 = vpop.xlane.xlu0 %526
  %v528 = vsel %vm420, %v297, 0.0
  %v529 = vadd.f32 %v295, %v528
  %530 = vadd.xlane.f32.xlu0 %v529
  %v531 = vpop.xlane.xlu0 %530
  %v532 = vsel %vm420, %v303, 0.0
  %v533 = vadd.f32 %v301, %v532
  %534 = vadd.xlane.f32.xlu0 %v533
  %v535 = vpop.xlane.xlu0 %534
  %v536 = vsel %vm420, %v309, 0.0
  %v537 = vadd.f32 %v307, %v536
  %538 = vadd.xlane.f32.xlu0 %v537
  %v539 = vpop.xlane.xlu0 %538
  %v540 = vsel %vm420, %v315, 0.0
  %v541 = vadd.f32 %v313, %v540
  %542 = vadd.xlane.f32.xlu0 %v541
  %v543 = vpop.xlane.xlu0 %542
  %v544 = vsel %vm420, %v321, 0.0
  %v545 = vadd.f32 %v319, %v544
  %546 = vadd.xlane.f32.xlu0 %v545
  %v547 = vpop.xlane.xlu0 %546
  %v548 = vsel %vm420, %v327, 0.0
  %v549 = vadd.f32 %v325, %v548
  %550 = vadd.xlane.f32.xlu0 %v549
  %v551 = vpop.xlane.xlu0 %550
  %v552 = vsel %vm420, %v333, 0.0
  %v553 = vadd.f32 %v331, %v552
  %554 = vadd.xlane.f32.xlu0 %v553
  %v555 = vpop.xlane.xlu0 %554
  %v556 = vsel %vm420, %v339, 0.0
  %v557 = vadd.f32 %v337, %v556
  %558 = vadd.xlane.f32.xlu0 %v557
  %v559 = vpop.xlane.xlu0 %558
  %v560 = vsel %vm420, %v345, 0.0
  %v561 = vadd.f32 %v343, %v560
  %562 = vadd.xlane.f32.xlu0 %v561
  %v563 = vpop.xlane.xlu0 %562
  %v564 = vsel %vm420, %v351, 0.0
  %v565 = vadd.f32 %v349, %v564
  %566 = vadd.xlane.f32.xlu0 %v565
  %v567 = vpop.xlane.xlu0 %566
  %v568 = vsel %vm420, %v357, 0.0
  %v569 = vadd.f32 %v355, %v568
  %570 = vadd.xlane.f32.xlu0 %v569
  %v571 = vpop.xlane.xlu0 %570
  %v572 = vsel %vm420, %v363, 0.0
  %v573 = vadd.f32 %v361, %v572
  %574 = vadd.xlane.f32.xlu0 %v573
  %v575 = vpop.xlane.xlu0 %574
  %v576 = vsel %vm420, %v369, 0.0
  %v577 = vadd.f32 %v367, %v576
  %578 = vadd.xlane.f32.xlu0 %v577
  %v579 = vpop.xlane.xlu0 %578
  %v580 = vsel %vm420, %v375, 0.0
  %v581 = vadd.f32 %v373, %v580
  %582 = vadd.xlane.f32.xlu0 %v581
  %v583 = vpop.xlane.xlu0 %582
  %v584 = vsel %vm420, %v381, 0.0
  %v585 = vadd.f32 %v379, %v584
  %586 = vadd.xlane.f32.xlu0 %v585
  %v587 = vpop.xlane.xlu0 %586
  %v588 = vsel %vm420, %v387, 0.0
  %v589 = vadd.f32 %v385, %v588
  %590 = vadd.xlane.f32.xlu0 %v589
  %v591 = vpop.xlane.xlu0 %590
  %v592 = vsel %vm420, %v393, 0.0
  %v593 = vadd.f32 %v391, %v592
  %594 = vadd.xlane.f32.xlu0 %v593
  %v595 = vpop.xlane.xlu0 %594
  %v596 = vsel %vm420, %v399, 0.0
  %v597 = vadd.f32 %v397, %v596
  %598 = vadd.xlane.f32.xlu0 %v597
  %v599 = vpop.xlane.xlu0 %598
  %v600 = vsel %vm420, %v405, 0.0
  %v601 = vadd.f32 %v403, %v600
  %602 = vadd.xlane.f32.xlu0 %v601
  %v603 = vpop.xlane.xlu0 %602
  %v604 = vsel %vm420, %v411, 0.0
  %v605 = vadd.f32 %v409, %v604
  %606 = vadd.xlane.f32.xlu0 %v605
  %v607 = vpop.xlane.xlu0 %606
  %v608 = vsel %vm420, %v417, 0.0
  %v609 = vadd.f32 %v415, %v608
  %610 = vadd.xlane.f32.xlu0 %v609
  %v611 = vpop.xlane.xlu0 %610
  %v612 = vadd.f32 %v487, 0.0
  %v613 = vadd.f32 %v491, 0.0
  %v614 = vadd.f32 %v495, 0.0
  %v615 = vadd.f32 %v499, 0.0
  %v616 = vadd.f32 %v503, 0.0
  %v617 = vadd.f32 %v507, 0.0
  %v618 = vadd.f32 %v511, 0.0
  %v619 = vadd.f32 %v515, 0.0
  %v620 = vadd.f32 %v519, 0.0
  %v621 = vadd.f32 %v523, 0.0
  %v622 = vadd.f32 %v527, 0.0
  %v623 = vadd.f32 %v531, 0.0
  %v624 = vadd.f32 %v535, 0.0
  %v625 = vadd.f32 %v539, 0.0
  %v626 = vadd.f32 %v543, 0.0
  %v627 = vadd.f32 %v547, 0.0
  %v628 = vadd.f32 %v551, 0.0
  %v629 = vadd.f32 %v555, 0.0
  %v630 = vadd.f32 %v559, 0.0
  %v631 = vadd.f32 %v563, 0.0
  %v632 = vadd.f32 %v567, 0.0
  %v633 = vadd.f32 %v571, 0.0
  %v634 = vadd.f32 %v575, 0.0
  %v635 = vadd.f32 %v579, 0.0
  %v636 = vadd.f32 %v583, 0.0
  %v637 = vadd.f32 %v587, 0.0
  %v638 = vadd.f32 %v591, 0.0
  %v639 = vadd.f32 %v595, 0.0
  %v640 = vadd.f32 %v599, 0.0
  %v641 = vadd.f32 %v603, 0.0
  %v642 = vadd.f32 %v607, 0.0
  %v643 = vadd.f32 %v611, 0.0
  %s644 = scalar_lea.vmem %s0, 128
  %v645 = vld [vmem:[%s644] sm:$0xff]
  %v646 = vld [vmem:[%s644 + $0x8] sm:$0xff]
  %v647 = vld [vmem:[%s644 + $0x10] sm:$0xff]
  %v648 = vld [vmem:[%s644 + $0x18] sm:$0xff]
  %v649 = vld [vmem:[%s644 + $0x20] sm:$0xff]
  %v650 = vld [vmem:[%s644 + $0x28] sm:$0xff]
  %v651 = vld [vmem:[%s644 + $0x30] sm:$0xff]
  %v652 = vld [vmem:[%s644 + $0x38] sm:$0xff]
  %v653 = vld [vmem:[%s644 + $0x40] sm:$0xff]
  %v654 = vld [vmem:[%s644 + $0x48] sm:$0xff]
  %v655 = vld [vmem:[%s644 + $0x50] sm:$0xff]
  %v656 = vld [vmem:[%s644 + $0x58] sm:$0xff]
  %v657 = vld [vmem:[%s644 + $0x60] sm:$0xff]
  %v658 = vld [vmem:[%s644 + $0x68] sm:$0xff]
  %v659 = vld [vmem:[%s644 + $0x70] sm:$0xff]
  %v660 = vld [vmem:[%s644 + $0x78] sm:$0xff]
  %661 = vmatprep.subr.mxu0 0.0
  %662 = vmatpush1.msra.mxu0 0.0
  %663 = vmatprep.subr.mxu0 0.0
  %664 = vmatpush1.msra.mxu0 0.0
  %665 = vmatprep.subr.mxu0 0.0
  %666 = vmatpush1.msra.mxu0 0.0
  %667 = vmatprep.subr.mxu0 0.0
  %668 = vmatpush1.msra.mxu0 0.0
  %669 = vmatprep.subr.mxu0 0.0
  %670 = vmatpush1.msra.mxu0 0.0
  %671 = vmatprep.subr.mxu0 0.0
  %672 = vmatpush1.msra.mxu0 0.0
  %673 = vmatprep.subr.mxu0 0.0
  %674 = vmatpush1.msra.mxu0 0.0
  %675 = vmatprep.subr.mxu0 0.0
  %676 = vmatpush1.msra.mxu0 0.0
  %677 = vmatprep.subr.mxu0 %v660
  %678 = vmatpush1.msra.mxu0 %v659
  %679 = vmatprep.subr.mxu0 %v658
  %680 = vmatpush1.msra.mxu0 %v657
  %681 = vmatprep.subr.mxu0 %v656
  %682 = vmatpush1.msra.mxu0 %v655
  %683 = vmatprep.subr.mxu0 %v654
  %684 = vmatpush1.msra.mxu0 %v653
  %685 = vmatprep.subr.mxu0 %v652
  %686 = vmatpush1.msra.mxu0 %v651
  %687 = vmatprep.subr.mxu0 %v650
  %688 = vmatpush1.msra.mxu0 %v649
  %689 = vmatprep.subr.mxu0 %v648
  %690 = vmatpush1.msra.mxu0 %v647
  %691 = vmatprep.subr.mxu0 %v646
  %692 = vmatpush1.msra.mxu0 %v645
  %693 = vmatprep.subr.mxu0 0.0
  %694 = vmatpush2.msra.mxu0 0.0
  %695 = vmatprep.subr.mxu0 0.0
  %696 = vmatpush2.msra.mxu0 0.0
  %697 = vmatprep.subr.mxu0 0.0
  %698 = vmatpush2.msra.mxu0 0.0
  %699 = vmatprep.subr.mxu0 0.0
  %700 = vmatpush2.msra.mxu0 0.0
  %701 = vmatprep.subr.mxu0 0.0
  %702 = vmatpush2.msra.mxu0 0.0
  %703 = vmatprep.subr.mxu0 0.0
  %704 = vmatpush2.msra.mxu0 0.0
  %705 = vmatprep.subr.mxu0 0.0
  %706 = vmatpush2.msra.mxu0 0.0
  %707 = vmatprep.subr.mxu0 0.0
  %708 = vmatpush2.msra.mxu0 0.0
  %709 = vmatprep.subr.mxu0 0.0
  %710 = vmatpush2.msra.mxu0 0.0
  %711 = vmatprep.subr.mxu0 0.0
  %712 = vmatpush2.msra.mxu0 0.0
  %713 = vmatprep.subr.mxu0 0.0
  %714 = vmatpush2.msra.mxu0 0.0
  %715 = vmatprep.subr.mxu0 0.0
  %716 = vmatpush2.msra.mxu0 0.0
  %717 = vmatprep.subr.mxu0 0.0
  %718 = vmatpush2.msra.mxu0 0.0
  %719 = vmatprep.subr.mxu0 0.0
  %720 = vmatpush2.msra.mxu0 0.0
  %721 = vmatprep.subr.mxu0 0.0
  %722 = vmatpush2.msra.mxu0 0.0
  %723 = vmatprep.subr.mxu0 0.0
  %724 = vmatpush2.msra.mxu0 0.0
  %725 = vmatprep.mubr.f32.mxu0 0.0
  %726 = vmatmul.mubr.f32.gmra.mxu0 %v67
  %v727 = vpop.f32.mrf.mxu0
  %v728 = vadd.f32 0.0, %v727
  %v729 = vpop.f32.mrf.mxu0
  %v730 = vadd.f32 0.0, %v729
  %731 = vmatprep.mubr.f32.mxu0 0.0
  %732 = vmatmul.mubr.f32.gmra.mxu0 %v70
  %v733 = vpop.f32.mrf.mxu0
  %v734 = vadd.f32 0.0, %v733
  %v735 = vpop.f32.mrf.mxu0
  %v736 = vadd.f32 0.0, %v735
  %737 = vmatprep.mubr.f32.mxu0 0.0
  %738 = vmatmul.mubr.f32.gmra.mxu0 %v73
  %v739 = vpop.f32.mrf.mxu0
  %v740 = vadd.f32 0.0, %v739
  %v741 = vpop.f32.mrf.mxu0
  %v742 = vadd.f32 0.0, %v741
  %743 = vmatprep.mubr.f32.mxu0 0.0
  %744 = vmatmul.mubr.f32.gmra.mxu0 %v76
  %v745 = vpop.f32.mrf.mxu0
  %v746 = vadd.f32 0.0, %v745
  %v747 = vpop.f32.mrf.mxu0
  %v748 = vadd.f32 0.0, %v747
  %749 = vmatprep.mubr.f32.mxu0 0.0
  %750 = vmatmul.mubr.f32.gmra.mxu0 %v79
  %v751 = vpop.f32.mrf.mxu0
  %v752 = vadd.f32 0.0, %v751
  %v753 = vpop.f32.mrf.mxu0
  %v754 = vadd.f32 0.0, %v753
  %755 = vmatprep.mubr.f32.mxu0 0.0
  %756 = vmatmul.mubr.f32.gmra.mxu0 %v82
  %v757 = vpop.f32.mrf.mxu0
  %v758 = vadd.f32 0.0, %v757
  %v759 = vpop.f32.mrf.mxu0
  %v760 = vadd.f32 0.0, %v759
  %761 = vmatprep.mubr.f32.mxu0 0.0
  %762 = vmatmul.mubr.f32.gmra.mxu0 %v85
  %v763 = vpop.f32.mrf.mxu0
  %v764 = vadd.f32 0.0, %v763
  %v765 = vpop.f32.mrf.mxu0
  %v766 = vadd.f32 0.0, %v765
  %767 = vmatprep.mubr.f32.mxu0 0.0
  %768 = vmatmul.mubr.f32.gmra.mxu0 %v88
  %v769 = vpop.f32.mrf.mxu0
  %v770 = vadd.f32 0.0, %v769
  %v771 = vpop.f32.mrf.mxu0
  %v772 = vadd.f32 0.0, %v771
  %773 = vmatprep.mubr.f32.mxu0 0.0
  %774 = vmatmul.mubr.f32.gmra.mxu0 %v91
  %v775 = vpop.f32.mrf.mxu0
  %v776 = vadd.f32 0.0, %v775
  %v777 = vpop.f32.mrf.mxu0
  %v778 = vadd.f32 0.0, %v777
  %779 = vmatprep.mubr.f32.mxu0 0.0
  %780 = vmatmul.mubr.f32.gmra.mxu0 %v94
  %v781 = vpop.f32.mrf.mxu0
  %v782 = vadd.f32 0.0, %v781
  %v783 = vpop.f32.mrf.mxu0
  %v784 = vadd.f32 0.0, %v783
  %785 = vmatprep.mubr.f32.mxu0 0.0
  %786 = vmatmul.mubr.f32.gmra.mxu0 %v97
  %v787 = vpop.f32.mrf.mxu0
  %v788 = vadd.f32 0.0, %v787
  %v789 = vpop.f32.mrf.mxu0
  %v790 = vadd.f32 0.0, %v789
  %791 = vmatprep.mubr.f32.mxu0 0.0
  %792 = vmatmul.mubr.f32.gmra.mxu0 %v100
  %v793 = vpop.f32.mrf.mxu0
  %v794 = vadd.f32 0.0, %v793
  %v795 = vpop.f32.mrf.mxu0
  %v796 = vadd.f32 0.0, %v795
  %797 = vmatprep.mubr.f32.mxu0 0.0
  %798 = vmatmul.mubr.f32.gmra.mxu0 %v103
  %v799 = vpop.f32.mrf.mxu0
  %v800 = vadd.f32 0.0, %v799
  %v801 = vpop.f32.mrf.mxu0
  %v802 = vadd.f32 0.0, %v801
  %803 = vmatprep.mubr.f32.mxu0 0.0
  %804 = vmatmul.mubr.f32.gmra.mxu0 %v106
  %v805 = vpop.f32.mrf.mxu0
  %v806 = vadd.f32 0.0, %v805
  %v807 = vpop.f32.mrf.mxu0
  %v808 = vadd.f32 0.0, %v807
  %809 = vmatprep.mubr.f32.mxu0 0.0
  %810 = vmatmul.mubr.f32.gmra.mxu0 %v109
  %v811 = vpop.f32.mrf.mxu0
  %v812 = vadd.f32 0.0, %v811
  %v813 = vpop.f32.mrf.mxu0
  %v814 = vadd.f32 0.0, %v813
  %815 = vmatprep.mubr.f32.mxu0 0.0
  %816 = vmatmul.mubr.f32.gmra.mxu0 %v112
  %v817 = vpop.f32.mrf.mxu0
  %v818 = vadd.f32 0.0, %v817
  %v819 = vpop.f32.mrf.mxu0
  %v820 = vadd.f32 0.0, %v819
  %821 = vmatprep.mubr.f32.mxu0 0.0
  %822 = vmatmul.mubr.f32.gmra.mxu0 %v115
  %v823 = vpop.f32.mrf.mxu0
  %v824 = vadd.f32 0.0, %v823
  %v825 = vpop.f32.mrf.mxu0
  %v826 = vadd.f32 0.0, %v825
  %827 = vmatprep.mubr.f32.mxu0 0.0
  %828 = vmatmul.mubr.f32.gmra.mxu0 %v118
  %v829 = vpop.f32.mrf.mxu0
  %v830 = vadd.f32 0.0, %v829
  %v831 = vpop.f32.mrf.mxu0
  %v832 = vadd.f32 0.0, %v831
  %833 = vmatprep.mubr.f32.mxu0 0.0
  %834 = vmatmul.mubr.f32.gmra.mxu0 %v121
  %v835 = vpop.f32.mrf.mxu0
  %v836 = vadd.f32 0.0, %v835
  %v837 = vpop.f32.mrf.mxu0
  %v838 = vadd.f32 0.0, %v837
  %839 = vmatprep.mubr.f32.mxu0 0.0
  %840 = vmatmul.mubr.f32.gmra.mxu0 %v124
  %v841 = vpop.f32.mrf.mxu0
  %v842 = vadd.f32 0.0, %v841
  %v843 = vpop.f32.mrf.mxu0
  %v844 = vadd.f32 0.0, %v843
  %845 = vmatprep.mubr.f32.mxu0 0.0
  %846 = vmatmul.mubr.f32.gmra.mxu0 %v127
  %v847 = vpop.f32.mrf.mxu0
  %v848 = vadd.f32 0.0, %v847
  %v849 = vpop.f32.mrf.mxu0
  %v850 = vadd.f32 0.0, %v849
  %851 = vmatprep.mubr.f32.mxu0 0.0
  %852 = vmatmul.mubr.f32.gmra.mxu0 %v130
  %v853 = vpop.f32.mrf.mxu0
  %v854 = vadd.f32 0.0, %v853
  %v855 = vpop.f32.mrf.mxu0
  %v856 = vadd.f32 0.0, %v855
  %857 = vmatprep.mubr.f32.mxu0 0.0
  %858 = vmatmul.mubr.f32.gmra.mxu0 %v133
  %v859 = vpop.f32.mrf.mxu0
  %v860 = vadd.f32 0.0, %v859
  %v861 = vpop.f32.mrf.mxu0
  %v862 = vadd.f32 0.0, %v861
  %863 = vmatprep.mubr.f32.mxu0 0.0
  %864 = vmatmul.mubr.f32.gmra.mxu0 %v136
  %v865 = vpop.f32.mrf.mxu0
  %v866 = vadd.f32 0.0, %v865
  %v867 = vpop.f32.mrf.mxu0
  %v868 = vadd.f32 0.0, %v867
  %869 = vmatprep.mubr.f32.mxu0 0.0
  %870 = vmatmul.mubr.f32.gmra.mxu0 %v139
  %v871 = vpop.f32.mrf.mxu0
  %v872 = vadd.f32 0.0, %v871
  %v873 = vpop.f32.mrf.mxu0
  %v874 = vadd.f32 0.0, %v873
  %875 = vmatprep.mubr.f32.mxu0 0.0
  %876 = vmatmul.mubr.f32.gmra.mxu0 %v142
  %v877 = vpop.f32.mrf.mxu0
  %v878 = vadd.f32 0.0, %v877
  %v879 = vpop.f32.mrf.mxu0
  %v880 = vadd.f32 0.0, %v879
  %881 = vmatprep.mubr.f32.mxu0 0.0
  %882 = vmatmul.mubr.f32.gmra.mxu0 %v145
  %v883 = vpop.f32.mrf.mxu0
  %v884 = vadd.f32 0.0, %v883
  %v885 = vpop.f32.mrf.mxu0
  %v886 = vadd.f32 0.0, %v885
  %887 = vmatprep.mubr.f32.mxu0 0.0
  %888 = vmatmul.mubr.f32.gmra.mxu0 %v148
  %v889 = vpop.f32.mrf.mxu0
  %v890 = vadd.f32 0.0, %v889
  %v891 = vpop.f32.mrf.mxu0
  %v892 = vadd.f32 0.0, %v891
  %893 = vmatprep.mubr.f32.mxu0 0.0
  %894 = vmatmul.mubr.f32.gmra.mxu0 %v151
  %v895 = vpop.f32.mrf.mxu0
  %v896 = vadd.f32 0.0, %v895
  %v897 = vpop.f32.mrf.mxu0
  %v898 = vadd.f32 0.0, %v897
  %899 = vmatprep.mubr.f32.mxu0 0.0
  %900 = vmatmul.mubr.f32.gmra.mxu0 %v154
  %v901 = vpop.f32.mrf.mxu0
  %v902 = vadd.f32 0.0, %v901
  %v903 = vpop.f32.mrf.mxu0
  %v904 = vadd.f32 0.0, %v903
  %905 = vmatprep.mubr.f32.mxu0 0.0
  %906 = vmatmul.mubr.f32.gmra.mxu0 %v157
  %v907 = vpop.f32.mrf.mxu0
  %v908 = vadd.f32 0.0, %v907
  %v909 = vpop.f32.mrf.mxu0
  %v910 = vadd.f32 0.0, %v909
  %911 = vmatprep.mubr.f32.mxu0 0.0
  %912 = vmatmul.mubr.f32.gmra.mxu0 %v160
  %v913 = vpop.f32.mrf.mxu0
  %v914 = vadd.f32 0.0, %v913
  %v915 = vpop.f32.mrf.mxu0
  %v916 = vadd.f32 0.0, %v915
  %917 = vdwg.mxu0
  %s918 = scalar_lea.vmem %s4, 512
  %919 = vst [vmem:[%s918] sm:$0xff] %v728
  %920 = vst.msk [vmem:[%s918 + $0x8] sm:$0xff] %vm420, %v730
  %921 = vst [vmem:[%s918 + $0x10] sm:$0xff] %v734
  %922 = vst.msk [vmem:[%s918 + $0x18] sm:$0xff] %vm420, %v736
  %923 = vst [vmem:[%s918 + $0x20] sm:$0xff] %v740
  %924 = vst.msk [vmem:[%s918 + $0x28] sm:$0xff] %vm420, %v742
  %925 = vst [vmem:[%s918 + $0x30] sm:$0xff] %v746
  %926 = vst.msk [vmem:[%s918 + $0x38] sm:$0xff] %vm420, %v748
  %927 = vst [vmem:[%s918 + $0x40] sm:$0xff] %v752
  %928 = vst.msk [vmem:[%s918 + $0x48] sm:$0xff] %vm420, %v754
  %929 = vst [vmem:[%s918 + $0x50] sm:$0xff] %v758
  %930 = vst.msk [vmem:[%s918 + $0x58] sm:$0xff] %vm420, %v760
  %931 = vst [vmem:[%s918 + $0x60] sm:$0xff] %v764
  %932 = vst.msk [vmem:[%s918 + $0x68] sm:$0xff] %vm420, %v766
  %933 = vst [vmem:[%s918 + $0x70] sm:$0xff] %v770
  %934 = vst.msk [vmem:[%s918 + $0x78] sm:$0xff] %vm420, %v772
  %935 = vst [vmem:[%s918 + $0x80] sm:$0xff] %v776
  %936 = vst.msk [vmem:[%s918 + $0x88] sm:$0xff] %vm420, %v778
  %937 = vst [vmem:[%s918 + $0x90] sm:$0xff] %v782
  %938 = vst.msk [vmem:[%s918 + $0x98] sm:$0xff] %vm420, %v784
  %939 = vst [vmem:[%s918 + $0xa0] sm:$0xff] %v788
  %940 = vst.msk [vmem:[%s918 + $0xa8] sm:$0xff] %vm420, %v790
  %941 = vst [vmem:[%s918 + $0xb0] sm:$0xff] %v794
  %942 = vst.msk [vmem:[%s918 + $0xb8] sm:$0xff] %vm420, %v796
  %943 = vst [vmem:[%s918 + $0xc0] sm:$0xff] %v800
  %944 = vst.msk [vmem:[%s918 + $0xc8] sm:$0xff] %vm420, %v802
  %945 = vst [vmem:[%s918 + $0xd0] sm:$0xff] %v806
  %946 = vst.msk [vmem:[%s918 + $0xd8] sm:$0xff] %vm420, %v808
  %947 = vst [vmem:[%s918 + $0xe0] sm:$0xff] %v812
  %948 = vst.msk [vmem:[%s918 + $0xe8] sm:$0xff] %vm420, %v814
  %949 = vst [vmem:[%s918 + $0xf0] sm:$0xff] %v818
  %950 = vst.msk [vmem:[%s918 + $0xf8] sm:$0xff] %vm420, %v820
  %951 = vst [vmem:[%s918 + $0x100] sm:$0xff] %v824
  %952 = vst.msk [vmem:[%s918 + $0x108] sm:$0xff] %vm420, %v826
  %953 = vst [vmem:[%s918 + $0x110] sm:$0xff] %v830
  %954 = vst.msk [vmem:[%s918 + $0x118] sm:$0xff] %vm420, %v832
  %955 = vst [vmem:[%s918 + $0x120] sm:$0xff] %v836
  %956 = vst.msk [vmem:[%s918 + $0x128] sm:$0xff] %vm420, %v838
  %957 = vst [vmem:[%s918 + $0x130] sm:$0xff] %v842
  %958 = vst.msk [vmem:[%s918 + $0x138] sm:$0xff] %vm420, %v844
  %959 = vst [vmem:[%s918 + $0x140] sm:$0xff] %v848
  %960 = vst.msk [vmem:[%s918 + $0x148] sm:$0xff] %vm420, %v850
  %961 = vst [vmem:[%s918 + $0x150] sm:$0xff] %v854
  %962 = vst.msk [vmem:[%s918 + $0x158] sm:$0xff] %vm420, %v856
  %963 = vst [vmem:[%s918 + $0x160] sm:$0xff] %v860
  %964 = vst.msk [vmem:[%s918 + $0x168] sm:$0xff] %vm420, %v862
  %965 = vst [vmem:[%s918 + $0x170] sm:$0xff] %v866
  %966 = vst.msk [vmem:[%s918 + $0x178] sm:$0xff] %vm420, %v868
  %967 = vst [vmem:[%s918 + $0x180] sm:$0xff] %v872
  %968 = vst.msk [vmem:[%s918 + $0x188] sm:$0xff] %vm420, %v874
  %969 = vst [vmem:[%s918 + $0x190] sm:$0xff] %v878
  %970 = vst.msk [vmem:[%s918 + $0x198] sm:$0xff] %vm420, %v880
  %971 = vst [vmem:[%s918 + $0x1a0] sm:$0xff] %v884
  %972 = vst.msk [vmem:[%s918 + $0x1a8] sm:$0xff] %vm420, %v886
  %973 = vst [vmem:[%s918 + $0x1b0] sm:$0xff] %v890
  %974 = vst.msk [vmem:[%s918 + $0x1b8] sm:$0xff] %vm420, %v892
  %975 = vst [vmem:[%s918 + $0x1c0] sm:$0xff] %v896
  %976 = vst.msk [vmem:[%s918 + $0x1c8] sm:$0xff] %vm420, %v898
  %977 = vst [vmem:[%s918 + $0x1d0] sm:$0xff] %v902
  %978 = vst.msk [vmem:[%s918 + $0x1d8] sm:$0xff] %vm420, %v904
  %979 = vst [vmem:[%s918 + $0x1e0] sm:$0xff] %v908
  %980 = vst.msk [vmem:[%s918 + $0x1e8] sm:$0xff] %vm420, %v910
  %981 = vst [vmem:[%s918 + $0x1f0] sm:$0xff] %v914
  %982 = vst.msk [vmem:[%s918 + $0x1f8] sm:$0xff] %vm420, %v916
  %v983 = vsel %vm420, %v730, 0.0
  %v984 = vadd.f32 %v728, %v983
  %985 = vadd.xlane.f32.xlu0 %v984
  %v986 = vpop.xlane.xlu0 %985
  %v987 = vsel %vm420, %v736, 0.0
  %v988 = vadd.f32 %v734, %v987
  %989 = vadd.xlane.f32.xlu0 %v988
  %v990 = vpop.xlane.xlu0 %989
  %v991 = vsel %vm420, %v742, 0.0
  %v992 = vadd.f32 %v740, %v991
  %993 = vadd.xlane.f32.xlu0 %v992
  %v994 = vpop.xlane.xlu0 %993
  %v995 = vsel %vm420, %v748, 0.0
  %v996 = vadd.f32 %v746, %v995
  %997 = vadd.xlane.f32.xlu0 %v996
  %v998 = vpop.xlane.xlu0 %997
  %v999 = vsel %vm420, %v754, 0.0
  %v1000 = vadd.f32 %v752, %v999
  %1001 = vadd.xlane.f32.xlu0 %v1000
  %v1002 = vpop.xlane.xlu0 %1001
  %v1003 = vsel %vm420, %v760, 0.0
  %v1004 = vadd.f32 %v758, %v1003
  %1005 = vadd.xlane.f32.xlu0 %v1004
  %v1006 = vpop.xlane.xlu0 %1005
  %v1007 = vsel %vm420, %v766, 0.0
  %v1008 = vadd.f32 %v764, %v1007
  %1009 = vadd.xlane.f32.xlu0 %v1008
  %v1010 = vpop.xlane.xlu0 %1009
  %v1011 = vsel %vm420, %v772, 0.0
  %v1012 = vadd.f32 %v770, %v1011
  %1013 = vadd.xlane.f32.xlu0 %v1012
  %v1014 = vpop.xlane.xlu0 %1013
  %v1015 = vsel %vm420, %v778, 0.0
  %v1016 = vadd.f32 %v776, %v1015
  %1017 = vadd.xlane.f32.xlu0 %v1016
  %v1018 = vpop.xlane.xlu0 %1017
  %v1019 = vsel %vm420, %v784, 0.0
  %v1020 = vadd.f32 %v782, %v1019
  %1021 = vadd.xlane.f32.xlu0 %v1020
  %v1022 = vpop.xlane.xlu0 %1021
  %v1023 = vsel %vm420, %v790, 0.0
  %v1024 = vadd.f32 %v788, %v1023
  %1025 = vadd.xlane.f32.xlu0 %v1024
  %v1026 = vpop.xlane.xlu0 %1025
  %v1027 = vsel %vm420, %v796, 0.0
  %v1028 = vadd.f32 %v794, %v1027
  %1029 = vadd.xlane.f32.xlu0 %v1028
  %v1030 = vpop.xlane.xlu0 %1029
  %v1031 = vsel %vm420, %v802, 0.0
  %v1032 = vadd.f32 %v800, %v1031
  %1033 = vadd.xlane.f32.xlu0 %v1032
  %v1034 = vpop.xlane.xlu0 %1033
  %v1035 = vsel %vm420, %v808, 0.0
  %v1036 = vadd.f32 %v806, %v1035
  %1037 = vadd.xlane.f32.xlu0 %v1036
  %v1038 = vpop.xlane.xlu0 %1037
  %v1039 = vsel %vm420, %v814, 0.0
  %v1040 = vadd.f32 %v812, %v1039
  %1041 = vadd.xlane.f32.xlu0 %v1040
  %v1042 = vpop.xlane.xlu0 %1041
  %v1043 = vsel %vm420, %v820, 0.0
  %v1044 = vadd.f32 %v818, %v1043
  %1045 = vadd.xlane.f32.xlu0 %v1044
  %v1046 = vpop.xlane.xlu0 %1045
  %v1047 = vsel %vm420, %v826, 0.0
  %v1048 = vadd.f32 %v824, %v1047
  %1049 = vadd.xlane.f32.xlu0 %v1048
  %v1050 = vpop.xlane.xlu0 %1049
  %v1051 = vsel %vm420, %v832, 0.0
  %v1052 = vadd.f32 %v830, %v1051
  %1053 = vadd.xlane.f32.xlu0 %v1052
  %v1054 = vpop.xlane.xlu0 %1053
  %v1055 = vsel %vm420, %v838, 0.0
  %v1056 = vadd.f32 %v836, %v1055
  %1057 = vadd.xlane.f32.xlu0 %v1056
  %v1058 = vpop.xlane.xlu0 %1057
  %v1059 = vsel %vm420, %v844, 0.0
  %v1060 = vadd.f32 %v842, %v1059
  %1061 = vadd.xlane.f32.xlu0 %v1060
  %v1062 = vpop.xlane.xlu0 %1061
  %v1063 = vsel %vm420, %v850, 0.0
  %v1064 = vadd.f32 %v848, %v1063
  %1065 = vadd.xlane.f32.xlu0 %v1064
  %v1066 = vpop.xlane.xlu0 %1065
  %v1067 = vsel %vm420, %v856, 0.0
  %v1068 = vadd.f32 %v854, %v1067
  %1069 = vadd.xlane.f32.xlu0 %v1068
  %v1070 = vpop.xlane.xlu0 %1069
  %v1071 = vsel %vm420, %v862, 0.0
  %v1072 = vadd.f32 %v860, %v1071
  %1073 = vadd.xlane.f32.xlu0 %v1072
  %v1074 = vpop.xlane.xlu0 %1073
  %v1075 = vsel %vm420, %v868, 0.0
  %v1076 = vadd.f32 %v866, %v1075
  %1077 = vadd.xlane.f32.xlu0 %v1076
  %v1078 = vpop.xlane.xlu0 %1077
  %v1079 = vsel %vm420, %v874, 0.0
  %v1080 = vadd.f32 %v872, %v1079
  %1081 = vadd.xlane.f32.xlu0 %v1080
  %v1082 = vpop.xlane.xlu0 %1081
  %v1083 = vsel %vm420, %v880, 0.0
  %v1084 = vadd.f32 %v878, %v1083
  %1085 = vadd.xlane.f32.xlu0 %v1084
  %v1086 = vpop.xlane.xlu0 %1085
  %v1087 = vsel %vm420, %v886, 0.0
  %v1088 = vadd.f32 %v884, %v1087
  %1089 = vadd.xlane.f32.xlu0 %v1088
  %v1090 = vpop.xlane.xlu0 %1089
  %v1091 = vsel %vm420, %v892, 0.0
  %v1092 = vadd.f32 %v890, %v1091
  %1093 = vadd.xlane.f32.xlu0 %v1092
  %v1094 = vpop.xlane.xlu0 %1093
  %v1095 = vsel %vm420, %v898, 0.0
  %v1096 = vadd.f32 %v896, %v1095
  %1097 = vadd.xlane.f32.xlu0 %v1096
  %v1098 = vpop.xlane.xlu0 %1097
  %v1099 = vsel %vm420, %v904, 0.0
  %v1100 = vadd.f32 %v902, %v1099
  %1101 = vadd.xlane.f32.xlu0 %v1100
  %v1102 = vpop.xlane.xlu0 %1101
  %v1103 = vsel %vm420, %v910, 0.0
  %v1104 = vadd.f32 %v908, %v1103
  %1105 = vadd.xlane.f32.xlu0 %v1104
  %v1106 = vpop.xlane.xlu0 %1105
  %v1107 = vsel %vm420, %v916, 0.0
  %v1108 = vadd.f32 %v914, %v1107
  %1109 = vadd.xlane.f32.xlu0 %v1108
  %v1110 = vpop.xlane.xlu0 %1109
  %v1111 = vadd.f32 %v612, %v986
  %v1112 = vadd.f32 %v613, %v990
  %v1113 = vadd.f32 %v614, %v994
  %v1114 = vadd.f32 %v615, %v998
  %v1115 = vadd.f32 %v616, %v1002
  %v1116 = vadd.f32 %v617, %v1006
  %v1117 = vadd.f32 %v618, %v1010
  %v1118 = vadd.f32 %v619, %v1014
  %v1119 = vadd.f32 %v620, %v1018
  %v1120 = vadd.f32 %v621, %v1022
  %v1121 = vadd.f32 %v622, %v1026
  %v1122 = vadd.f32 %v623, %v1030
  %v1123 = vadd.f32 %v624, %v1034
  %v1124 = vadd.f32 %v625, %v1038
  %v1125 = vadd.f32 %v626, %v1042
  %v1126 = vadd.f32 %v627, %v1046
  %v1127 = vadd.f32 %v628, %v1050
  %v1128 = vadd.f32 %v629, %v1054
  %v1129 = vadd.f32 %v630, %v1058
  %v1130 = vadd.f32 %v631, %v1062
  %v1131 = vadd.f32 %v632, %v1066
  %v1132 = vadd.f32 %v633, %v1070
  %v1133 = vadd.f32 %v634, %v1074
  %v1134 = vadd.f32 %v635, %v1078
  %v1135 = vadd.f32 %v636, %v1082
  %v1136 = vadd.f32 %v637, %v1086
  %v1137 = vadd.f32 %v638, %v1090
  %v1138 = vadd.f32 %v639, %v1094
  %v1139 = vadd.f32 %v640, %v1098
  %v1140 = vadd.f32 %v641, %v1102
  %v1141 = vadd.f32 %v642, %v1106
  %v1142 = vadd.f32 %v643, %v1110
  %v1143 = vmul.f32 %v1111, 0.0025510204
  %v1144 = vmul.f32 %v1112, 0.0025510204
  %v1145 = vmul.f32 %v1113, 0.0025510204
  %v1146 = vmul.f32 %v1114, 0.0025510204
  %v1147 = vmul.f32 %v1115, 0.0025510204
  %v1148 = vmul.f32 %v1116, 0.0025510204
  %v1149 = vmul.f32 %v1117, 0.0025510204
  %v1150 = vmul.f32 %v1118, 0.0025510204
  %v1151 = vmul.f32 %v1119, 0.0025510204
  %v1152 = vmul.f32 %v1120, 0.0025510204
  %v1153 = vmul.f32 %v1121, 0.0025510204
  %v1154 = vmul.f32 %v1122, 0.0025510204
  %v1155 = vmul.f32 %v1123, 0.0025510204
  %v1156 = vmul.f32 %v1124, 0.0025510204
  %v1157 = vmul.f32 %v1125, 0.0025510204
  %v1158 = vmul.f32 %v1126, 0.0025510204
  %v1159 = vmul.f32 %v1127, 0.0025510204
  %v1160 = vmul.f32 %v1128, 0.0025510204
  %v1161 = vmul.f32 %v1129, 0.0025510204
  %v1162 = vmul.f32 %v1130, 0.0025510204
  %v1163 = vmul.f32 %v1131, 0.0025510204
  %v1164 = vmul.f32 %v1132, 0.0025510204
  %v1165 = vmul.f32 %v1133, 0.0025510204
  %v1166 = vmul.f32 %v1134, 0.0025510204
  %v1167 = vmul.f32 %v1135, 0.0025510204
  %v1168 = vmul.f32 %v1136, 0.0025510204
  %v1169 = vmul.f32 %v1137, 0.0025510204
  %v1170 = vmul.f32 %v1138, 0.0025510204
  %v1171 = vmul.f32 %v1139, 0.0025510204
  %v1172 = vmul.f32 %v1140, 0.0025510204
  %v1173 = vmul.f32 %v1141, 0.0025510204
  %v1174 = vmul.f32 %v1142, 0.0025510204
  %v1175 = vld [vmem:[%s4] sm:$0xff]
  %v1176 = vld [vmem:[%s4 + $0x8] sm:$0xff]
  %v1177 = vld [vmem:[%s4 + $0x10] sm:$0xff]
  %v1178 = vld [vmem:[%s4 + $0x18] sm:$0xff]
  %v1179 = vld [vmem:[%s4 + $0x20] sm:$0xff]
  %v1180 = vld [vmem:[%s4 + $0x28] sm:$0xff]
  %v1181 = vld [vmem:[%s4 + $0x30] sm:$0xff]
  %v1182 = vld [vmem:[%s4 + $0x38] sm:$0xff]
  %v1183 = vld [vmem:[%s4 + $0x40] sm:$0xff]
  %v1184 = vld [vmem:[%s4 + $0x48] sm:$0xff]
  %v1185 = vld [vmem:[%s4 + $0x50] sm:$0xff]
  %v1186 = vld [vmem:[%s4 + $0x58] sm:$0xff]
  %v1187 = vld [vmem:[%s4 + $0x60] sm:$0xff]
  %v1188 = vld [vmem:[%s4 + $0x68] sm:$0xff]
  %v1189 = vld [vmem:[%s4 + $0x70] sm:$0xff]
  %v1190 = vld [vmem:[%s4 + $0x78] sm:$0xff]
  %v1191 = vld [vmem:[%s4 + $0x80] sm:$0xff]
  %v1192 = vld [vmem:[%s4 + $0x88] sm:$0xff]
  %v1193 = vld [vmem:[%s4 + $0x90] sm:$0xff]
  %v1194 = vld [vmem:[%s4 + $0x98] sm:$0xff]
  %v1195 = vld [vmem:[%s4 + $0xa0] sm:$0xff]
  %v1196 = vld [vmem:[%s4 + $0xa8] sm:$0xff]
  %v1197 = vld [vmem:[%s4 + $0xb0] sm:$0xff]
  %v1198 = vld [vmem:[%s4 + $0xb8] sm:$0xff]
  %v1199 = vld [vmem:[%s4 + $0xc0] sm:$0xff]
  %v1200 = vld [vmem:[%s4 + $0xc8] sm:$0xff]
  %v1201 = vld [vmem:[%s4 + $0xd0] sm:$0xff]
  %v1202 = vld [vmem:[%s4 + $0xd8] sm:$0xff]
  %v1203 = vld [vmem:[%s4 + $0xe0] sm:$0xff]
  %v1204 = vld [vmem:[%s4 + $0xe8] sm:$0xff]
  %v1205 = vld [vmem:[%s4 + $0xf0] sm:$0xff]
  %v1206 = vld [vmem:[%s4 + $0xf8] sm:$0xff]
  %v1207 = vld [vmem:[%s4 + $0x100] sm:$0xff]
  %v1208 = vld [vmem:[%s4 + $0x108] sm:$0xff]
  %v1209 = vld [vmem:[%s4 + $0x110] sm:$0xff]
  %v1210 = vld [vmem:[%s4 + $0x118] sm:$0xff]
  %v1211 = vld [vmem:[%s4 + $0x120] sm:$0xff]
  %v1212 = vld [vmem:[%s4 + $0x128] sm:$0xff]
  %v1213 = vld [vmem:[%s4 + $0x130] sm:$0xff]
  %v1214 = vld [vmem:[%s4 + $0x138] sm:$0xff]
  %v1215 = vld [vmem:[%s4 + $0x140] sm:$0xff]
  %v1216 = vld [vmem:[%s4 + $0x148] sm:$0xff]
  %v1217 = vld [vmem:[%s4 + $0x150] sm:$0xff]
  %v1218 = vld [vmem:[%s4 + $0x158] sm:$0xff]
  %v1219 = vld [vmem:[%s4 + $0x160] sm:$0xff]
  %v1220 = vld [vmem:[%s4 + $0x168] sm:$0xff]
  %v1221 = vld [vmem:[%s4 + $0x170] sm:$0xff]
  %v1222 = vld [vmem:[%s4 + $0x178] sm:$0xff]
  %v1223 = vld [vmem:[%s4 + $0x180] sm:$0xff]
  %v1224 = vld [vmem:[%s4 + $0x188] sm:$0xff]
  %v1225 = vld [vmem:[%s4 + $0x190] sm:$0xff]
  %v1226 = vld [vmem:[%s4 + $0x198] sm:$0xff]
  %v1227 = vld [vmem:[%s4 + $0x1a0] sm:$0xff]
  %v1228 = vld [vmem:[%s4 + $0x1a8] sm:$0xff]
  %v1229 = vld [vmem:[%s4 + $0x1b0] sm:$0xff]
  %v1230 = vld [vmem:[%s4 + $0x1b8] sm:$0xff]
  %v1231 = vld [vmem:[%s4 + $0x1c0] sm:$0xff]
  %v1232 = vld [vmem:[%s4 + $0x1c8] sm:$0xff]
  %v1233 = vld [vmem:[%s4 + $0x1d0] sm:$0xff]
  %v1234 = vld [vmem:[%s4 + $0x1d8] sm:$0xff]
  %v1235 = vld [vmem:[%s4 + $0x1e0] sm:$0xff]
  %v1236 = vld [vmem:[%s4 + $0x1e8] sm:$0xff]
  %v1237 = vld [vmem:[%s4 + $0x1f0] sm:$0xff]
  %v1238 = vld [vmem:[%s4 + $0x1f8] sm:$0xff]
  %v1239 = vsub.f32 %v1175, %v1143
  %v1240 = vsub.f32 %v1176, %v1143
  %v1241 = vsub.f32 %v1177, %v1144
  %v1242 = vsub.f32 %v1178, %v1144
  %v1243 = vsub.f32 %v1179, %v1145
  %v1244 = vsub.f32 %v1180, %v1145
  %v1245 = vsub.f32 %v1181, %v1146
  %v1246 = vsub.f32 %v1182, %v1146
  %v1247 = vsub.f32 %v1183, %v1147
  %v1248 = vsub.f32 %v1184, %v1147
  %v1249 = vsub.f32 %v1185, %v1148
  %v1250 = vsub.f32 %v1186, %v1148
  %v1251 = vsub.f32 %v1187, %v1149
  %v1252 = vsub.f32 %v1188, %v1149
  %v1253 = vsub.f32 %v1189, %v1150
  %v1254 = vsub.f32 %v1190, %v1150
  %v1255 = vsub.f32 %v1191, %v1151
  %v1256 = vsub.f32 %v1192, %v1151
  %v1257 = vsub.f32 %v1193, %v1152
  %v1258 = vsub.f32 %v1194, %v1152
  %v1259 = vsub.f32 %v1195, %v1153
  %v1260 = vsub.f32 %v1196, %v1153
  %v1261 = vsub.f32 %v1197, %v1154
  %v1262 = vsub.f32 %v1198, %v1154
  %v1263 = vsub.f32 %v1199, %v1155
  %v1264 = vsub.f32 %v1200, %v1155
  %v1265 = vsub.f32 %v1201, %v1156
  %v1266 = vsub.f32 %v1202, %v1156
  %v1267 = vsub.f32 %v1203, %v1157
  %v1268 = vsub.f32 %v1204, %v1157
  %v1269 = vsub.f32 %v1205, %v1158
  %v1270 = vsub.f32 %v1206, %v1158
  %v1271 = vsub.f32 %v1207, %v1159
  %v1272 = vsub.f32 %v1208, %v1159
  %v1273 = vsub.f32 %v1209, %v1160
  %v1274 = vsub.f32 %v1210, %v1160
  %v1275 = vsub.f32 %v1211, %v1161
  %v1276 = vsub.f32 %v1212, %v1161
  %v1277 = vsub.f32 %v1213, %v1162
  %v1278 = vsub.f32 %v1214, %v1162
  %v1279 = vsub.f32 %v1215, %v1163
  %v1280 = vsub.f32 %v1216, %v1163
  %v1281 = vsub.f32 %v1217, %v1164
  %v1282 = vsub.f32 %v1218, %v1164
  %v1283 = vsub.f32 %v1219, %v1165
  %v1284 = vsub.f32 %v1220, %v1165
  %v1285 = vsub.f32 %v1221, %v1166
  %v1286 = vsub.f32 %v1222, %v1166
  %v1287 = vsub.f32 %v1223, %v1167
  %v1288 = vsub.f32 %v1224, %v1167
  %v1289 = vsub.f32 %v1225, %v1168
  %v1290 = vsub.f32 %v1226, %v1168
  %v1291 = vsub.f32 %v1227, %v1169
  %v1292 = vsub.f32 %v1228, %v1169
  %v1293 = vsub.f32 %v1229, %v1170
  %v1294 = vsub.f32 %v1230, %v1170
  %v1295 = vsub.f32 %v1231, %v1171
  %v1296 = vsub.f32 %v1232, %v1171
  %v1297 = vsub.f32 %v1233, %v1172
  %v1298 = vsub.f32 %v1234, %v1172
  %v1299 = vsub.f32 %v1235, %v1173
  %v1300 = vsub.f32 %v1236, %v1173
  %v1301 = vsub.f32 %v1237, %v1174
  %v1302 = vsub.f32 %v1238, %v1174
  %v1303 = vmul.f32 %v1239, %v1239
  %v1304 = vmul.f32 %v1240, %v1240
  %v1305 = vmul.f32 %v1241, %v1241
  %v1306 = vmul.f32 %v1242, %v1242
  %v1307 = vmul.f32 %v1243, %v1243
  %v1308 = vmul.f32 %v1244, %v1244
  %v1309 = vmul.f32 %v1245, %v1245
  %v1310 = vmul.f32 %v1246, %v1246
  %v1311 = vmul.f32 %v1247, %v1247
  %v1312 = vmul.f32 %v1248, %v1248
  %v1313 = vmul.f32 %v1249, %v1249
  %v1314 = vmul.f32 %v1250, %v1250
  %v1315 = vmul.f32 %v1251, %v1251
  %v1316 = vmul.f32 %v1252, %v1252
  %v1317 = vmul.f32 %v1253, %v1253
  %v1318 = vmul.f32 %v1254, %v1254
  %v1319 = vmul.f32 %v1255, %v1255
  %v1320 = vmul.f32 %v1256, %v1256
  %v1321 = vmul.f32 %v1257, %v1257
  %v1322 = vmul.f32 %v1258, %v1258
  %v1323 = vmul.f32 %v1259, %v1259
  %v1324 = vmul.f32 %v1260, %v1260
  %v1325 = vmul.f32 %v1261, %v1261
  %v1326 = vmul.f32 %v1262, %v1262
  %v1327 = vmul.f32 %v1263, %v1263
  %v1328 = vmul.f32 %v1264, %v1264
  %v1329 = vmul.f32 %v1265, %v1265
  %v1330 = vmul.f32 %v1266, %v1266
  %v1331 = vmul.f32 %v1267, %v1267
  %v1332 = vmul.f32 %v1268, %v1268
  %v1333 = vmul.f32 %v1269, %v1269
  %v1334 = vmul.f32 %v1270, %v1270
  %v1335 = vmul.f32 %v1271, %v1271
  %v1336 = vmul.f32 %v1272, %v1272
  %v1337 = vmul.f32 %v1273, %v1273
  %v1338 = vmul.f32 %v1274, %v1274
  %v1339 = vmul.f32 %v1275, %v1275
  %v1340 = vmul.f32 %v1276, %v1276
  %v1341 = vmul.f32 %v1277, %v1277
  %v1342 = vmul.f32 %v1278, %v1278
  %v1343 = vmul.f32 %v1279, %v1279
  %v1344 = vmul.f32 %v1280, %v1280
  %v1345 = vmul.f32 %v1281, %v1281
  %v1346 = vmul.f32 %v1282, %v1282
  %v1347 = vmul.f32 %v1283, %v1283
  %v1348 = vmul.f32 %v1284, %v1284
  %v1349 = vmul.f32 %v1285, %v1285
  %v1350 = vmul.f32 %v1286, %v1286
  %v1351 = vmul.f32 %v1287, %v1287
  %v1352 = vmul.f32 %v1288, %v1288
  %v1353 = vmul.f32 %v1289, %v1289
  %v1354 = vmul.f32 %v1290, %v1290
  %v1355 = vmul.f32 %v1291, %v1291
  %v1356 = vmul.f32 %v1292, %v1292
  %v1357 = vmul.f32 %v1293, %v1293
  %v1358 = vmul.f32 %v1294, %v1294
  %v1359 = vmul.f32 %v1295, %v1295
  %v1360 = vmul.f32 %v1296, %v1296
  %v1361 = vmul.f32 %v1297, %v1297
  %v1362 = vmul.f32 %v1298, %v1298
  %v1363 = vmul.f32 %v1299, %v1299
  %v1364 = vmul.f32 %v1300, %v1300
  %v1365 = vmul.f32 %v1301, %v1301
  %v1366 = vmul.f32 %v1302, %v1302
  %v1367 = vsel %vm420, %v1304, 0.0
  %v1368 = vadd.f32 %v1303, %v1367
  %1369 = vadd.xlane.f32.xlu0 %v1368
  %v1370 = vpop.xlane.xlu0 %1369
  %v1371 = vsel %vm420, %v1306, 0.0
  %v1372 = vadd.f32 %v1305, %v1371
  %1373 = vadd.xlane.f32.xlu0 %v1372
  %v1374 = vpop.xlane.xlu0 %1373
  %v1375 = vsel %vm420, %v1308, 0.0
  %v1376 = vadd.f32 %v1307, %v1375
  %1377 = vadd.xlane.f32.xlu0 %v1376
  %v1378 = vpop.xlane.xlu0 %1377
  %v1379 = vsel %vm420, %v1310, 0.0
  %v1380 = vadd.f32 %v1309, %v1379
  %1381 = vadd.xlane.f32.xlu0 %v1380
  %v1382 = vpop.xlane.xlu0 %1381
  %v1383 = vsel %vm420, %v1312, 0.0
  %v1384 = vadd.f32 %v1311, %v1383
  %1385 = vadd.xlane.f32.xlu0 %v1384
  %v1386 = vpop.xlane.xlu0 %1385
  %v1387 = vsel %vm420, %v1314, 0.0
  %v1388 = vadd.f32 %v1313, %v1387
  %1389 = vadd.xlane.f32.xlu0 %v1388
  %v1390 = vpop.xlane.xlu0 %1389
  %v1391 = vsel %vm420, %v1316, 0.0
  %v1392 = vadd.f32 %v1315, %v1391
  %1393 = vadd.xlane.f32.xlu0 %v1392
  %v1394 = vpop.xlane.xlu0 %1393
  %v1395 = vsel %vm420, %v1318, 0.0
  %v1396 = vadd.f32 %v1317, %v1395
  %1397 = vadd.xlane.f32.xlu0 %v1396
  %v1398 = vpop.xlane.xlu0 %1397
  %v1399 = vsel %vm420, %v1320, 0.0
  %v1400 = vadd.f32 %v1319, %v1399
  %1401 = vadd.xlane.f32.xlu0 %v1400
  %v1402 = vpop.xlane.xlu0 %1401
  %v1403 = vsel %vm420, %v1322, 0.0
  %v1404 = vadd.f32 %v1321, %v1403
  %1405 = vadd.xlane.f32.xlu0 %v1404
  %v1406 = vpop.xlane.xlu0 %1405
  %v1407 = vsel %vm420, %v1324, 0.0
  %v1408 = vadd.f32 %v1323, %v1407
  %1409 = vadd.xlane.f32.xlu0 %v1408
  %v1410 = vpop.xlane.xlu0 %1409
  %v1411 = vsel %vm420, %v1326, 0.0
  %v1412 = vadd.f32 %v1325, %v1411
  %1413 = vadd.xlane.f32.xlu0 %v1412
  %v1414 = vpop.xlane.xlu0 %1413
  %v1415 = vsel %vm420, %v1328, 0.0
  %v1416 = vadd.f32 %v1327, %v1415
  %1417 = vadd.xlane.f32.xlu0 %v1416
  %v1418 = vpop.xlane.xlu0 %1417
  %v1419 = vsel %vm420, %v1330, 0.0
  %v1420 = vadd.f32 %v1329, %v1419
  %1421 = vadd.xlane.f32.xlu0 %v1420
  %v1422 = vpop.xlane.xlu0 %1421
  %v1423 = vsel %vm420, %v1332, 0.0
  %v1424 = vadd.f32 %v1331, %v1423
  %1425 = vadd.xlane.f32.xlu0 %v1424
  %v1426 = vpop.xlane.xlu0 %1425
  %v1427 = vsel %vm420, %v1334, 0.0
  %v1428 = vadd.f32 %v1333, %v1427
  %1429 = vadd.xlane.f32.xlu0 %v1428
  %v1430 = vpop.xlane.xlu0 %1429
  %v1431 = vsel %vm420, %v1336, 0.0
  %v1432 = vadd.f32 %v1335, %v1431
  %1433 = vadd.xlane.f32.xlu0 %v1432
  %v1434 = vpop.xlane.xlu0 %1433
  %v1435 = vsel %vm420, %v1338, 0.0
  %v1436 = vadd.f32 %v1337, %v1435
  %1437 = vadd.xlane.f32.xlu0 %v1436
  %v1438 = vpop.xlane.xlu0 %1437
  %v1439 = vsel %vm420, %v1340, 0.0
  %v1440 = vadd.f32 %v1339, %v1439
  %1441 = vadd.xlane.f32.xlu0 %v1440
  %v1442 = vpop.xlane.xlu0 %1441
  %v1443 = vsel %vm420, %v1342, 0.0
  %v1444 = vadd.f32 %v1341, %v1443
  %1445 = vadd.xlane.f32.xlu0 %v1444
  %v1446 = vpop.xlane.xlu0 %1445
  %v1447 = vsel %vm420, %v1344, 0.0
  %v1448 = vadd.f32 %v1343, %v1447
  %1449 = vadd.xlane.f32.xlu0 %v1448
  %v1450 = vpop.xlane.xlu0 %1449
  %v1451 = vsel %vm420, %v1346, 0.0
  %v1452 = vadd.f32 %v1345, %v1451
  %1453 = vadd.xlane.f32.xlu0 %v1452
  %v1454 = vpop.xlane.xlu0 %1453
  %v1455 = vsel %vm420, %v1348, 0.0
  %v1456 = vadd.f32 %v1347, %v1455
  %1457 = vadd.xlane.f32.xlu0 %v1456
  %v1458 = vpop.xlane.xlu0 %1457
  %v1459 = vsel %vm420, %v1350, 0.0
  %v1460 = vadd.f32 %v1349, %v1459
  %1461 = vadd.xlane.f32.xlu0 %v1460
  %v1462 = vpop.xlane.xlu0 %1461
  %v1463 = vsel %vm420, %v1352, 0.0
  %v1464 = vadd.f32 %v1351, %v1463
  %1465 = vadd.xlane.f32.xlu0 %v1464
  %v1466 = vpop.xlane.xlu0 %1465
  %v1467 = vsel %vm420, %v1354, 0.0
  %v1468 = vadd.f32 %v1353, %v1467
  %1469 = vadd.xlane.f32.xlu0 %v1468
  %v1470 = vpop.xlane.xlu0 %1469
  %v1471 = vsel %vm420, %v1356, 0.0
  %v1472 = vadd.f32 %v1355, %v1471
  %1473 = vadd.xlane.f32.xlu0 %v1472
  %v1474 = vpop.xlane.xlu0 %1473
  %v1475 = vsel %vm420, %v1358, 0.0
  %v1476 = vadd.f32 %v1357, %v1475
  %1477 = vadd.xlane.f32.xlu0 %v1476
  %v1478 = vpop.xlane.xlu0 %1477
  %v1479 = vsel %vm420, %v1360, 0.0
  %v1480 = vadd.f32 %v1359, %v1479
  %1481 = vadd.xlane.f32.xlu0 %v1480
  %v1482 = vpop.xlane.xlu0 %1481
  %v1483 = vsel %vm420, %v1362, 0.0
  %v1484 = vadd.f32 %v1361, %v1483
  %1485 = vadd.xlane.f32.xlu0 %v1484
  %v1486 = vpop.xlane.xlu0 %1485
  %v1487 = vsel %vm420, %v1364, 0.0
  %v1488 = vadd.f32 %v1363, %v1487
  %1489 = vadd.xlane.f32.xlu0 %v1488
  %v1490 = vpop.xlane.xlu0 %1489
  %v1491 = vsel %vm420, %v1366, 0.0
  %v1492 = vadd.f32 %v1365, %v1491
  %1493 = vadd.xlane.f32.xlu0 %v1492
  %v1494 = vpop.xlane.xlu0 %1493
  %v1495 = vadd.f32 %v1370, 0.0
  %v1496 = vadd.f32 %v1374, 0.0
  %v1497 = vadd.f32 %v1378, 0.0
  %v1498 = vadd.f32 %v1382, 0.0
  %v1499 = vadd.f32 %v1386, 0.0
  %v1500 = vadd.f32 %v1390, 0.0
  %v1501 = vadd.f32 %v1394, 0.0
  %v1502 = vadd.f32 %v1398, 0.0
  %v1503 = vadd.f32 %v1402, 0.0
  %v1504 = vadd.f32 %v1406, 0.0
  %v1505 = vadd.f32 %v1410, 0.0
  %v1506 = vadd.f32 %v1414, 0.0
  %v1507 = vadd.f32 %v1418, 0.0
  %v1508 = vadd.f32 %v1422, 0.0
  %v1509 = vadd.f32 %v1426, 0.0
  %v1510 = vadd.f32 %v1430, 0.0
  %v1511 = vadd.f32 %v1434, 0.0
  %v1512 = vadd.f32 %v1438, 0.0
  %v1513 = vadd.f32 %v1442, 0.0
  %v1514 = vadd.f32 %v1446, 0.0
  %v1515 = vadd.f32 %v1450, 0.0
  %v1516 = vadd.f32 %v1454, 0.0
  %v1517 = vadd.f32 %v1458, 0.0
  %v1518 = vadd.f32 %v1462, 0.0
  %v1519 = vadd.f32 %v1466, 0.0
  %v1520 = vadd.f32 %v1470, 0.0
  %v1521 = vadd.f32 %v1474, 0.0
  %v1522 = vadd.f32 %v1478, 0.0
  %v1523 = vadd.f32 %v1482, 0.0
  %v1524 = vadd.f32 %v1486, 0.0
  %v1525 = vadd.f32 %v1490, 0.0
  %v1526 = vadd.f32 %v1494, 0.0
  %v1527 = vld [vmem:[%s918] sm:$0xff]
  %v1528 = vld [vmem:[%s918 + $0x8] sm:$0xff]
  %v1529 = vld [vmem:[%s918 + $0x10] sm:$0xff]
  %v1530 = vld [vmem:[%s918 + $0x18] sm:$0xff]
  %v1531 = vld [vmem:[%s918 + $0x20] sm:$0xff]
  %v1532 = vld [vmem:[%s918 + $0x28] sm:$0xff]
  %v1533 = vld [vmem:[%s918 + $0x30] sm:$0xff]
  %v1534 = vld [vmem:[%s918 + $0x38] sm:$0xff]
  %v1535 = vld [vmem:[%s918 + $0x40] sm:$0xff]
  %v1536 = vld [vmem:[%s918 + $0x48] sm:$0xff]
  %v1537 = vld [vmem:[%s918 + $0x50] sm:$0xff]
  %v1538 = vld [vmem:[%s918 + $0x58] sm:$0xff]
  %v1539 = vld [vmem:[%s918 + $0x60] sm:$0xff]
  %v1540 = vld [vmem:[%s918 + $0x68] sm:$0xff]
  %v1541 = vld [vmem:[%s918 + $0x70] sm:$0xff]
  %v1542 = vld [vmem:[%s918 + $0x78] sm:$0xff]
  %v1543 = vld [vmem:[%s918 + $0x80] sm:$0xff]
  %v1544 = vld [vmem:[%s918 + $0x88] sm:$0xff]
  %v1545 = vld [vmem:[%s918 + $0x90] sm:$0xff]
  %v1546 = vld [vmem:[%s918 + $0x98] sm:$0xff]
  %v1547 = vld [vmem:[%s918 + $0xa0] sm:$0xff]
  %v1548 = vld [vmem:[%s918 + $0xa8] sm:$0xff]
  %v1549 = vld [vmem:[%s918 + $0xb0] sm:$0xff]
  %v1550 = vld [vmem:[%s918 + $0xb8] sm:$0xff]
  %v1551 = vld [vmem:[%s918 + $0xc0] sm:$0xff]
  %v1552 = vld [vmem:[%s918 + $0xc8] sm:$0xff]
  %v1553 = vld [vmem:[%s918 + $0xd0] sm:$0xff]
  %v1554 = vld [vmem:[%s918 + $0xd8] sm:$0xff]
  %v1555 = vld [vmem:[%s918 + $0xe0] sm:$0xff]
  %v1556 = vld [vmem:[%s918 + $0xe8] sm:$0xff]
  %v1557 = vld [vmem:[%s918 + $0xf0] sm:$0xff]
  %v1558 = vld [vmem:[%s918 + $0xf8] sm:$0xff]
  %v1559 = vld [vmem:[%s918 + $0x100] sm:$0xff]
  %v1560 = vld [vmem:[%s918 + $0x108] sm:$0xff]
  %v1561 = vld [vmem:[%s918 + $0x110] sm:$0xff]
  %v1562 = vld [vmem:[%s918 + $0x118] sm:$0xff]
  %v1563 = vld [vmem:[%s918 + $0x120] sm:$0xff]
  %v1564 = vld [vmem:[%s918 + $0x128] sm:$0xff]
  %v1565 = vld [vmem:[%s918 + $0x130] sm:$0xff]
  %v1566 = vld [vmem:[%s918 + $0x138] sm:$0xff]
  %v1567 = vld [vmem:[%s918 + $0x140] sm:$0xff]
  %v1568 = vld [vmem:[%s918 + $0x148] sm:$0xff]
  %v1569 = vld [vmem:[%s918 + $0x150] sm:$0xff]
  %v1570 = vld [vmem:[%s918 + $0x158] sm:$0xff]
  %v1571 = vld [vmem:[%s918 + $0x160] sm:$0xff]
  %v1572 = vld [vmem:[%s918 + $0x168] sm:$0xff]
  %v1573 = vld [vmem:[%s918 + $0x170] sm:$0xff]
  %v1574 = vld [vmem:[%s918 + $0x178] sm:$0xff]
  %v1575 = vld [vmem:[%s918 + $0x180] sm:$0xff]
  %v1576 = vld [vmem:[%s918 + $0x188] sm:$0xff]
  %v1577 = vld [vmem:[%s918 + $0x190] sm:$0xff]
  %v1578 = vld [vmem:[%s918 + $0x198] sm:$0xff]
  %v1579 = vld [vmem:[%s918 + $0x1a0] sm:$0xff]
  %v1580 = vld [vmem:[%s918 + $0x1a8] sm:$0xff]
  %v1581 = vld [vmem:[%s918 + $0x1b0] sm:$0xff]
  %v1582 = vld [vmem:[%s918 + $0x1b8] sm:$0xff]
  %v1583 = vld [vmem:[%s918 + $0x1c0] sm:$0xff]
  %v1584 = vld [vmem:[%s918 + $0x1c8] sm:$0xff]
  %v1585 = vld [vmem:[%s918 + $0x1d0] sm:$0xff]
  %v1586 = vld [vmem:[%s918 + $0x1d8] sm:$0xff]
  %v1587 = vld [vmem:[%s918 + $0x1e0] sm:$0xff]
  %v1588 = vld [vmem:[%s918 + $0x1e8] sm:$0xff]
  %v1589 = vld [vmem:[%s918 + $0x1f0] sm:$0xff]
  %v1590 = vld [vmem:[%s918 + $0x1f8] sm:$0xff]
  %v1591 = vsub.f32 %v1527, %v1143
  %v1592 = vsub.f32 %v1528, %v1143
  %v1593 = vsub.f32 %v1529, %v1144
  %v1594 = vsub.f32 %v1530, %v1144
  %v1595 = vsub.f32 %v1531, %v1145
  %v1596 = vsub.f32 %v1532, %v1145
  %v1597 = vsub.f32 %v1533, %v1146
  %v1598 = vsub.f32 %v1534, %v1146
  %v1599 = vsub.f32 %v1535, %v1147
  %v1600 = vsub.f32 %v1536, %v1147
  %v1601 = vsub.f32 %v1537, %v1148
  %v1602 = vsub.f32 %v1538, %v1148
  %v1603 = vsub.f32 %v1539, %v1149
  %v1604 = vsub.f32 %v1540, %v1149
  %v1605 = vsub.f32 %v1541, %v1150
  %v1606 = vsub.f32 %v1542, %v1150
  %v1607 = vsub.f32 %v1543, %v1151
  %v1608 = vsub.f32 %v1544, %v1151
  %v1609 = vsub.f32 %v1545, %v1152
  %v1610 = vsub.f32 %v1546, %v1152
  %v1611 = vsub.f32 %v1547, %v1153
  %v1612 = vsub.f32 %v1548, %v1153
  %v1613 = vsub.f32 %v1549, %v1154
  %v1614 = vsub.f32 %v1550, %v1154
  %v1615 = vsub.f32 %v1551, %v1155
  %v1616 = vsub.f32 %v1552, %v1155
  %v1617 = vsub.f32 %v1553, %v1156
  %v1618 = vsub.f32 %v1554, %v1156
  %v1619 = vsub.f32 %v1555, %v1157
  %v1620 = vsub.f32 %v1556, %v1157
  %v1621 = vsub.f32 %v1557, %v1158
  %v1622 = vsub.f32 %v1558, %v1158
  %v1623 = vsub.f32 %v1559, %v1159
  %v1624 = vsub.f32 %v1560, %v1159
  %v1625 = vsub.f32 %v1561, %v1160
  %v1626 = vsub.f32 %v1562, %v1160
  %v1627 = vsub.f32 %v1563, %v1161
  %v1628 = vsub.f32 %v1564, %v1161
  %v1629 = vsub.f32 %v1565, %v1162
  %v1630 = vsub.f32 %v1566, %v1162
  %v1631 = vsub.f32 %v1567, %v1163
  %v1632 = vsub.f32 %v1568, %v1163
  %v1633 = vsub.f32 %v1569, %v1164
  %v1634 = vsub.f32 %v1570, %v1164
  %v1635 = vsub.f32 %v1571, %v1165
  %v1636 = vsub.f32 %v1572, %v1165
  %v1637 = vsub.f32 %v1573, %v1166
  %v1638 = vsub.f32 %v1574, %v1166
  %v1639 = vsub.f32 %v1575, %v1167
  %v1640 = vsub.f32 %v1576, %v1167
  %v1641 = vsub.f32 %v1577, %v1168
  %v1642 = vsub.f32 %v1578, %v1168
  %v1643 = vsub.f32 %v1579, %v1169
  %v1644 = vsub.f32 %v1580, %v1169
  %v1645 = vsub.f32 %v1581, %v1170
  %v1646 = vsub.f32 %v1582, %v1170
  %v1647 = vsub.f32 %v1583, %v1171
  %v1648 = vsub.f32 %v1584, %v1171
  %v1649 = vsub.f32 %v1585, %v1172
  %v1650 = vsub.f32 %v1586, %v1172
  %v1651 = vsub.f32 %v1587, %v1173
  %v1652 = vsub.f32 %v1588, %v1173
  %v1653 = vsub.f32 %v1589, %v1174
  %v1654 = vsub.f32 %v1590, %v1174
  %v1655 = vmul.f32 %v1591, %v1591
  %v1656 = vmul.f32 %v1592, %v1592
  %v1657 = vmul.f32 %v1593, %v1593
  %v1658 = vmul.f32 %v1594, %v1594
  %v1659 = vmul.f32 %v1595, %v1595
  %v1660 = vmul.f32 %v1596, %v1596
  %v1661 = vmul.f32 %v1597, %v1597
  %v1662 = vmul.f32 %v1598, %v1598
  %v1663 = vmul.f32 %v1599, %v1599
  %v1664 = vmul.f32 %v1600, %v1600
  %v1665 = vmul.f32 %v1601, %v1601
  %v1666 = vmul.f32 %v1602, %v1602
  %v1667 = vmul.f32 %v1603, %v1603
  %v1668 = vmul.f32 %v1604, %v1604
  %v1669 = vmul.f32 %v1605, %v1605
  %v1670 = vmul.f32 %v1606, %v1606
  %v1671 = vmul.f32 %v1607, %v1607
  %v1672 = vmul.f32 %v1608, %v1608
  %v1673 = vmul.f32 %v1609, %v1609
  %v1674 = vmul.f32 %v1610, %v1610
  %v1675 = vmul.f32 %v1611, %v1611
  %v1676 = vmul.f32 %v1612, %v1612
  %v1677 = vmul.f32 %v1613, %v1613
  %v1678 = vmul.f32 %v1614, %v1614
  %v1679 = vmul.f32 %v1615, %v1615
  %v1680 = vmul.f32 %v1616, %v1616
  %v1681 = vmul.f32 %v1617, %v1617
  %v1682 = vmul.f32 %v1618, %v1618
  %v1683 = vmul.f32 %v1619, %v1619
  %v1684 = vmul.f32 %v1620, %v1620
  %v1685 = vmul.f32 %v1621, %v1621
  %v1686 = vmul.f32 %v1622, %v1622
  %v1687 = vmul.f32 %v1623, %v1623
  %v1688 = vmul.f32 %v1624, %v1624
  %v1689 = vmul.f32 %v1625, %v1625
  %v1690 = vmul.f32 %v1626, %v1626
  %v1691 = vmul.f32 %v1627, %v1627
  %v1692 = vmul.f32 %v1628, %v1628
  %v1693 = vmul.f32 %v1629, %v1629
  %v1694 = vmul.f32 %v1630, %v1630
  %v1695 = vmul.f32 %v1631, %v1631
  %v1696 = vmul.f32 %v1632, %v1632
  %v1697 = vmul.f32 %v1633, %v1633
  %v1698 = vmul.f32 %v1634, %v1634
  %v1699 = vmul.f32 %v1635, %v1635
  %v1700 = vmul.f32 %v1636, %v1636
  %v1701 = vmul.f32 %v1637, %v1637
  %v1702 = vmul.f32 %v1638, %v1638
  %v1703 = vmul.f32 %v1639, %v1639
  %v1704 = vmul.f32 %v1640, %v1640
  %v1705 = vmul.f32 %v1641, %v1641
  %v1706 = vmul.f32 %v1642, %v1642
  %v1707 = vmul.f32 %v1643, %v1643
  %v1708 = vmul.f32 %v1644, %v1644
  %v1709 = vmul.f32 %v1645, %v1645
  %v1710 = vmul.f32 %v1646, %v1646
  %v1711 = vmul.f32 %v1647, %v1647
  %v1712 = vmul.f32 %v1648, %v1648
  %v1713 = vmul.f32 %v1649, %v1649
  %v1714 = vmul.f32 %v1650, %v1650
  %v1715 = vmul.f32 %v1651, %v1651
  %v1716 = vmul.f32 %v1652, %v1652
  %v1717 = vmul.f32 %v1653, %v1653
  %v1718 = vmul.f32 %v1654, %v1654
  %v1719 = vsel %vm420, %v1656, 0.0
  %v1720 = vadd.f32 %v1655, %v1719
  %1721 = vadd.xlane.f32.xlu0 %v1720
  %v1722 = vpop.xlane.xlu0 %1721
  %v1723 = vsel %vm420, %v1658, 0.0
  %v1724 = vadd.f32 %v1657, %v1723
  %1725 = vadd.xlane.f32.xlu0 %v1724
  %v1726 = vpop.xlane.xlu0 %1725
  %v1727 = vsel %vm420, %v1660, 0.0
  %v1728 = vadd.f32 %v1659, %v1727
  %1729 = vadd.xlane.f32.xlu0 %v1728
  %v1730 = vpop.xlane.xlu0 %1729
  %v1731 = vsel %vm420, %v1662, 0.0
  %v1732 = vadd.f32 %v1661, %v1731
  %1733 = vadd.xlane.f32.xlu0 %v1732
  %v1734 = vpop.xlane.xlu0 %1733
  %v1735 = vsel %vm420, %v1664, 0.0
  %v1736 = vadd.f32 %v1663, %v1735
  %1737 = vadd.xlane.f32.xlu0 %v1736
  %v1738 = vpop.xlane.xlu0 %1737
  %v1739 = vsel %vm420, %v1666, 0.0
  %v1740 = vadd.f32 %v1665, %v1739
  %1741 = vadd.xlane.f32.xlu0 %v1740
  %v1742 = vpop.xlane.xlu0 %1741
  %v1743 = vsel %vm420, %v1668, 0.0
  %v1744 = vadd.f32 %v1667, %v1743
  %1745 = vadd.xlane.f32.xlu0 %v1744
  %v1746 = vpop.xlane.xlu0 %1745
  %v1747 = vsel %vm420, %v1670, 0.0
  %v1748 = vadd.f32 %v1669, %v1747
  %1749 = vadd.xlane.f32.xlu0 %v1748
  %v1750 = vpop.xlane.xlu0 %1749
  %v1751 = vsel %vm420, %v1672, 0.0
  %v1752 = vadd.f32 %v1671, %v1751
  %1753 = vadd.xlane.f32.xlu0 %v1752
  %v1754 = vpop.xlane.xlu0 %1753
  %v1755 = vsel %vm420, %v1674, 0.0
  %v1756 = vadd.f32 %v1673, %v1755
  %1757 = vadd.xlane.f32.xlu0 %v1756
  %v1758 = vpop.xlane.xlu0 %1757
  %v1759 = vsel %vm420, %v1676, 0.0
  %v1760 = vadd.f32 %v1675, %v1759
  %1761 = vadd.xlane.f32.xlu0 %v1760
  %v1762 = vpop.xlane.xlu0 %1761
  %v1763 = vsel %vm420, %v1678, 0.0
  %v1764 = vadd.f32 %v1677, %v1763
  %1765 = vadd.xlane.f32.xlu0 %v1764
  %v1766 = vpop.xlane.xlu0 %1765
  %v1767 = vsel %vm420, %v1680, 0.0
  %v1768 = vadd.f32 %v1679, %v1767
  %1769 = vadd.xlane.f32.xlu0 %v1768
  %v1770 = vpop.xlane.xlu0 %1769
  %v1771 = vsel %vm420, %v1682, 0.0
  %v1772 = vadd.f32 %v1681, %v1771
  %1773 = vadd.xlane.f32.xlu0 %v1772
  %v1774 = vpop.xlane.xlu0 %1773
  %v1775 = vsel %vm420, %v1684, 0.0
  %v1776 = vadd.f32 %v1683, %v1775
  %1777 = vadd.xlane.f32.xlu0 %v1776
  %v1778 = vpop.xlane.xlu0 %1777
  %v1779 = vsel %vm420, %v1686, 0.0
  %v1780 = vadd.f32 %v1685, %v1779
  %1781 = vadd.xlane.f32.xlu0 %v1780
  %v1782 = vpop.xlane.xlu0 %1781
  %v1783 = vsel %vm420, %v1688, 0.0
  %v1784 = vadd.f32 %v1687, %v1783
  %1785 = vadd.xlane.f32.xlu0 %v1784
  %v1786 = vpop.xlane.xlu0 %1785
  %v1787 = vsel %vm420, %v1690, 0.0
  %v1788 = vadd.f32 %v1689, %v1787
  %1789 = vadd.xlane.f32.xlu0 %v1788
  %v1790 = vpop.xlane.xlu0 %1789
  %v1791 = vsel %vm420, %v1692, 0.0
  %v1792 = vadd.f32 %v1691, %v1791
  %1793 = vadd.xlane.f32.xlu0 %v1792
  %v1794 = vpop.xlane.xlu0 %1793
  %v1795 = vsel %vm420, %v1694, 0.0
  %v1796 = vadd.f32 %v1693, %v1795
  %1797 = vadd.xlane.f32.xlu0 %v1796
  %v1798 = vpop.xlane.xlu0 %1797
  %v1799 = vsel %vm420, %v1696, 0.0
  %v1800 = vadd.f32 %v1695, %v1799
  %1801 = vadd.xlane.f32.xlu0 %v1800
  %v1802 = vpop.xlane.xlu0 %1801
  %v1803 = vsel %vm420, %v1698, 0.0
  %v1804 = vadd.f32 %v1697, %v1803
  %1805 = vadd.xlane.f32.xlu0 %v1804
  %v1806 = vpop.xlane.xlu0 %1805
  %v1807 = vsel %vm420, %v1700, 0.0
  %v1808 = vadd.f32 %v1699, %v1807
  %1809 = vadd.xlane.f32.xlu0 %v1808
  %v1810 = vpop.xlane.xlu0 %1809
  %v1811 = vsel %vm420, %v1702, 0.0
  %v1812 = vadd.f32 %v1701, %v1811
  %1813 = vadd.xlane.f32.xlu0 %v1812
  %v1814 = vpop.xlane.xlu0 %1813
  %v1815 = vsel %vm420, %v1704, 0.0
  %v1816 = vadd.f32 %v1703, %v1815
  %1817 = vadd.xlane.f32.xlu0 %v1816
  %v1818 = vpop.xlane.xlu0 %1817
  %v1819 = vsel %vm420, %v1706, 0.0
  %v1820 = vadd.f32 %v1705, %v1819
  %1821 = vadd.xlane.f32.xlu0 %v1820
  %v1822 = vpop.xlane.xlu0 %1821
  %v1823 = vsel %vm420, %v1708, 0.0
  %v1824 = vadd.f32 %v1707, %v1823
  %1825 = vadd.xlane.f32.xlu0 %v1824
  %v1826 = vpop.xlane.xlu0 %1825
  %v1827 = vsel %vm420, %v1710, 0.0
  %v1828 = vadd.f32 %v1709, %v1827
  %1829 = vadd.xlane.f32.xlu0 %v1828
  %v1830 = vpop.xlane.xlu0 %1829
  %v1831 = vsel %vm420, %v1712, 0.0
  %v1832 = vadd.f32 %v1711, %v1831
  %1833 = vadd.xlane.f32.xlu0 %v1832
  %v1834 = vpop.xlane.xlu0 %1833
  %v1835 = vsel %vm420, %v1714, 0.0
  %v1836 = vadd.f32 %v1713, %v1835
  %1837 = vadd.xlane.f32.xlu0 %v1836
  %v1838 = vpop.xlane.xlu0 %1837
  %v1839 = vsel %vm420, %v1716, 0.0
  %v1840 = vadd.f32 %v1715, %v1839
  %1841 = vadd.xlane.f32.xlu0 %v1840
  %v1842 = vpop.xlane.xlu0 %1841
  %v1843 = vsel %vm420, %v1718, 0.0
  %v1844 = vadd.f32 %v1717, %v1843
  %1845 = vadd.xlane.f32.xlu0 %v1844
  %v1846 = vpop.xlane.xlu0 %1845
  %v1847 = vadd.f32 %v1495, %v1722
  %v1848 = vadd.f32 %v1496, %v1726
  %v1849 = vadd.f32 %v1497, %v1730
  %v1850 = vadd.f32 %v1498, %v1734
  %v1851 = vadd.f32 %v1499, %v1738
  %v1852 = vadd.f32 %v1500, %v1742
  %v1853 = vadd.f32 %v1501, %v1746
  %v1854 = vadd.f32 %v1502, %v1750
  %v1855 = vadd.f32 %v1503, %v1754
  %v1856 = vadd.f32 %v1504, %v1758
  %v1857 = vadd.f32 %v1505, %v1762
  %v1858 = vadd.f32 %v1506, %v1766
  %v1859 = vadd.f32 %v1507, %v1770
  %v1860 = vadd.f32 %v1508, %v1774
  %v1861 = vadd.f32 %v1509, %v1778
  %v1862 = vadd.f32 %v1510, %v1782
  %v1863 = vadd.f32 %v1511, %v1786
  %v1864 = vadd.f32 %v1512, %v1790
  %v1865 = vadd.f32 %v1513, %v1794
  %v1866 = vadd.f32 %v1514, %v1798
  %v1867 = vadd.f32 %v1515, %v1802
  %v1868 = vadd.f32 %v1516, %v1806
  %v1869 = vadd.f32 %v1517, %v1810
  %v1870 = vadd.f32 %v1518, %v1814
  %v1871 = vadd.f32 %v1519, %v1818
  %v1872 = vadd.f32 %v1520, %v1822
  %v1873 = vadd.f32 %v1521, %v1826
  %v1874 = vadd.f32 %v1522, %v1830
  %v1875 = vadd.f32 %v1523, %v1834
  %v1876 = vadd.f32 %v1524, %v1838
  %v1877 = vadd.f32 %v1525, %v1842
  %v1878 = vadd.f32 %v1526, %v1846
  %v1879 = vmul.f32 %v1847, 0.0025510204
  %v1880 = vmul.f32 %v1848, 0.0025510204
  %v1881 = vmul.f32 %v1849, 0.0025510204
  %v1882 = vmul.f32 %v1850, 0.0025510204
  %v1883 = vmul.f32 %v1851, 0.0025510204
  %v1884 = vmul.f32 %v1852, 0.0025510204
  %v1885 = vmul.f32 %v1853, 0.0025510204
  %v1886 = vmul.f32 %v1854, 0.0025510204
  %v1887 = vmul.f32 %v1855, 0.0025510204
  %v1888 = vmul.f32 %v1856, 0.0025510204
  %v1889 = vmul.f32 %v1857, 0.0025510204
  %v1890 = vmul.f32 %v1858, 0.0025510204
  %v1891 = vmul.f32 %v1859, 0.0025510204
  %v1892 = vmul.f32 %v1860, 0.0025510204
  %v1893 = vmul.f32 %v1861, 0.0025510204
  %v1894 = vmul.f32 %v1862, 0.0025510204
  %v1895 = vmul.f32 %v1863, 0.0025510204
  %v1896 = vmul.f32 %v1864, 0.0025510204
  %v1897 = vmul.f32 %v1865, 0.0025510204
  %v1898 = vmul.f32 %v1866, 0.0025510204
  %v1899 = vmul.f32 %v1867, 0.0025510204
  %v1900 = vmul.f32 %v1868, 0.0025510204
  %v1901 = vmul.f32 %v1869, 0.0025510204
  %v1902 = vmul.f32 %v1870, 0.0025510204
  %v1903 = vmul.f32 %v1871, 0.0025510204
  %v1904 = vmul.f32 %v1872, 0.0025510204
  %v1905 = vmul.f32 %v1873, 0.0025510204
  %v1906 = vmul.f32 %v1874, 0.0025510204
  %v1907 = vmul.f32 %v1875, 0.0025510204
  %v1908 = vmul.f32 %v1876, 0.0025510204
  %v1909 = vmul.f32 %v1877, 0.0025510204
  %v1910 = vmul.f32 %v1878, 0.0025510204
  %v1911 = vadd.f32 %v1879, 1e-05
  %v1912 = vadd.f32 %v1880, 1e-05
  %v1913 = vadd.f32 %v1881, 1e-05
  %v1914 = vadd.f32 %v1882, 1e-05
  %v1915 = vadd.f32 %v1883, 1e-05
  %v1916 = vadd.f32 %v1884, 1e-05
  %v1917 = vadd.f32 %v1885, 1e-05
  %v1918 = vadd.f32 %v1886, 1e-05
  %v1919 = vadd.f32 %v1887, 1e-05
  %v1920 = vadd.f32 %v1888, 1e-05
  %v1921 = vadd.f32 %v1889, 1e-05
  %v1922 = vadd.f32 %v1890, 1e-05
  %v1923 = vadd.f32 %v1891, 1e-05
  %v1924 = vadd.f32 %v1892, 1e-05
  %v1925 = vadd.f32 %v1893, 1e-05
  %v1926 = vadd.f32 %v1894, 1e-05
  %v1927 = vadd.f32 %v1895, 1e-05
  %v1928 = vadd.f32 %v1896, 1e-05
  %v1929 = vadd.f32 %v1897, 1e-05
  %v1930 = vadd.f32 %v1898, 1e-05
  %v1931 = vadd.f32 %v1899, 1e-05
  %v1932 = vadd.f32 %v1900, 1e-05
  %v1933 = vadd.f32 %v1901, 1e-05
  %v1934 = vadd.f32 %v1902, 1e-05
  %v1935 = vadd.f32 %v1903, 1e-05
  %v1936 = vadd.f32 %v1904, 1e-05
  %v1937 = vadd.f32 %v1905, 1e-05
  %v1938 = vadd.f32 %v1906, 1e-05
  %v1939 = vadd.f32 %v1907, 1e-05
  %v1940 = vadd.f32 %v1908, 1e-05
  %v1941 = vadd.f32 %v1909, 1e-05
  %v1942 = vadd.f32 %v1910, 1e-05
  %v1943 = vrsqrt.pop %v1911
  %v1944 = vrsqrt.pop %v1912
  %v1945 = vrsqrt.pop %v1913
  %v1946 = vrsqrt.pop %v1914
  %v1947 = vrsqrt.pop %v1915
  %v1948 = vrsqrt.pop %v1916
  %v1949 = vrsqrt.pop %v1917
  %v1950 = vrsqrt.pop %v1918
  %v1951 = vrsqrt.pop %v1919
  %v1952 = vrsqrt.pop %v1920
  %v1953 = vrsqrt.pop %v1921
  %v1954 = vrsqrt.pop %v1922
  %v1955 = vrsqrt.pop %v1923
  %v1956 = vrsqrt.pop %v1924
  %v1957 = vrsqrt.pop %v1925
  %v1958 = vrsqrt.pop %v1926
  %v1959 = vrsqrt.pop %v1927
  %v1960 = vrsqrt.pop %v1928
  %v1961 = vrsqrt.pop %v1929
  %v1962 = vrsqrt.pop %v1930
  %v1963 = vrsqrt.pop %v1931
  %v1964 = vrsqrt.pop %v1932
  %v1965 = vrsqrt.pop %v1933
  %v1966 = vrsqrt.pop %v1934
  %v1967 = vrsqrt.pop %v1935
  %v1968 = vrsqrt.pop %v1936
  %v1969 = vrsqrt.pop %v1937
  %v1970 = vrsqrt.pop %v1938
  %v1971 = vrsqrt.pop %v1939
  %v1972 = vrsqrt.pop %v1940
  %v1973 = vrsqrt.pop %v1941
  %v1974 = vrsqrt.pop %v1942
  %v1975 = vld [vmem:[%s2] sm:$0xff]
  %v1976 = vld [vmem:[%s2 + $0x8] sm:$0xff]
  %v1977 = vld [vmem:[%s2 + $0x10] sm:$0xff]
  %v1978 = vld [vmem:[%s2 + $0x18] sm:$0xff]
  %v1979 = vld [vmem:[%s2 + $0x20] sm:$0xff]
  %v1980 = vld [vmem:[%s2 + $0x28] sm:$0xff]
  %v1981 = vld [vmem:[%s2 + $0x30] sm:$0xff]
  %v1982 = vld [vmem:[%s2 + $0x38] sm:$0xff]
  %v1983 = vld [vmem:[%s2 + $0x40] sm:$0xff]
  %v1984 = vld [vmem:[%s2 + $0x48] sm:$0xff]
  %v1985 = vld [vmem:[%s2 + $0x50] sm:$0xff]
  %v1986 = vld [vmem:[%s2 + $0x58] sm:$0xff]
  %v1987 = vld [vmem:[%s2 + $0x60] sm:$0xff]
  %v1988 = vld [vmem:[%s2 + $0x68] sm:$0xff]
  %v1989 = vld [vmem:[%s2 + $0x70] sm:$0xff]
  %v1990 = vld [vmem:[%s2 + $0x78] sm:$0xff]
  %v1991 = vld [vmem:[%s2 + $0x80] sm:$0xff]
  %v1992 = vld [vmem:[%s2 + $0x88] sm:$0xff]
  %v1993 = vld [vmem:[%s2 + $0x90] sm:$0xff]
  %v1994 = vld [vmem:[%s2 + $0x98] sm:$0xff]
  %v1995 = vld [vmem:[%s2 + $0xa0] sm:$0xff]
  %v1996 = vld [vmem:[%s2 + $0xa8] sm:$0xff]
  %v1997 = vld [vmem:[%s2 + $0xb0] sm:$0xff]
  %v1998 = vld [vmem:[%s2 + $0xb8] sm:$0xff]
  %v1999 = vld [vmem:[%s2 + $0xc0] sm:$0xff]
  %v2000 = vld [vmem:[%s2 + $0xc8] sm:$0xff]
  %v2001 = vld [vmem:[%s2 + $0xd0] sm:$0xff]
  %v2002 = vld [vmem:[%s2 + $0xd8] sm:$0xff]
  %v2003 = vld [vmem:[%s2 + $0xe0] sm:$0xff]
  %v2004 = vld [vmem:[%s2 + $0xe8] sm:$0xff]
  %v2005 = vld [vmem:[%s2 + $0xf0] sm:$0xff]
  %v2006 = vld [vmem:[%s2 + $0xf8] sm:$0xff]
  %v2007 = vmul.f32 %v1975, %v1943
  %v2008 = vmul.f32 %v1976, %v1944
  %v2009 = vmul.f32 %v1977, %v1945
  %v2010 = vmul.f32 %v1978, %v1946
  %v2011 = vmul.f32 %v1979, %v1947
  %v2012 = vmul.f32 %v1980, %v1948
  %v2013 = vmul.f32 %v1981, %v1949
  %v2014 = vmul.f32 %v1982, %v1950
  %v2015 = vmul.f32 %v1983, %v1951
  %v2016 = vmul.f32 %v1984, %v1952
  %v2017 = vmul.f32 %v1985, %v1953
  %v2018 = vmul.f32 %v1986, %v1954
  %v2019 = vmul.f32 %v1987, %v1955
  %v2020 = vmul.f32 %v1988, %v1956
  %v2021 = vmul.f32 %v1989, %v1957
  %v2022 = vmul.f32 %v1990, %v1958
  %v2023 = vmul.f32 %v1991, %v1959
  %v2024 = vmul.f32 %v1992, %v1960
  %v2025 = vmul.f32 %v1993, %v1961
  %v2026 = vmul.f32 %v1994, %v1962
  %v2027 = vmul.f32 %v1995, %v1963
  %v2028 = vmul.f32 %v1996, %v1964
  %v2029 = vmul.f32 %v1997, %v1965
  %v2030 = vmul.f32 %v1998, %v1966
  %v2031 = vmul.f32 %v1999, %v1967
  %v2032 = vmul.f32 %v2000, %v1968
  %v2033 = vmul.f32 %v2001, %v1969
  %v2034 = vmul.f32 %v2002, %v1970
  %v2035 = vmul.f32 %v2003, %v1971
  %v2036 = vmul.f32 %v2004, %v1972
  %v2037 = vmul.f32 %v2005, %v1973
  %v2038 = vmul.f32 %v2006, %v1974
  %v2039 = vld [vmem:[%s3] sm:$0xff]
  %v2040 = vld [vmem:[%s3 + $0x8] sm:$0xff]
  %v2041 = vld [vmem:[%s3 + $0x10] sm:$0xff]
  %v2042 = vld [vmem:[%s3 + $0x18] sm:$0xff]
  %v2043 = vld [vmem:[%s3 + $0x20] sm:$0xff]
  %v2044 = vld [vmem:[%s3 + $0x28] sm:$0xff]
  %v2045 = vld [vmem:[%s3 + $0x30] sm:$0xff]
  %v2046 = vld [vmem:[%s3 + $0x38] sm:$0xff]
  %v2047 = vld [vmem:[%s3 + $0x40] sm:$0xff]
  %v2048 = vld [vmem:[%s3 + $0x48] sm:$0xff]
  %v2049 = vld [vmem:[%s3 + $0x50] sm:$0xff]
  %v2050 = vld [vmem:[%s3 + $0x58] sm:$0xff]
  %v2051 = vld [vmem:[%s3 + $0x60] sm:$0xff]
  %v2052 = vld [vmem:[%s3 + $0x68] sm:$0xff]
  %v2053 = vld [vmem:[%s3 + $0x70] sm:$0xff]
  %v2054 = vld [vmem:[%s3 + $0x78] sm:$0xff]
  %v2055 = vld [vmem:[%s3 + $0x80] sm:$0xff]
  %v2056 = vld [vmem:[%s3 + $0x88] sm:$0xff]
  %v2057 = vld [vmem:[%s3 + $0x90] sm:$0xff]
  %v2058 = vld [vmem:[%s3 + $0x98] sm:$0xff]
  %v2059 = vld [vmem:[%s3 + $0xa0] sm:$0xff]
  %v2060 = vld [vmem:[%s3 + $0xa8] sm:$0xff]
  %v2061 = vld [vmem:[%s3 + $0xb0] sm:$0xff]
  %v2062 = vld [vmem:[%s3 + $0xb8] sm:$0xff]
  %v2063 = vld [vmem:[%s3 + $0xc0] sm:$0xff]
  %v2064 = vld [vmem:[%s3 + $0xc8] sm:$0xff]
  %v2065 = vld [vmem:[%s3 + $0xd0] sm:$0xff]
  %v2066 = vld [vmem:[%s3 + $0xd8] sm:$0xff]
  %v2067 = vld [vmem:[%s3 + $0xe0] sm:$0xff]
  %v2068 = vld [vmem:[%s3 + $0xe8] sm:$0xff]
  %v2069 = vld [vmem:[%s3 + $0xf0] sm:$0xff]
  %v2070 = vld [vmem:[%s3 + $0xf8] sm:$0xff]
  %v2071 = vmul.f32 %v1143, %v2007
  %v2072 = vmul.f32 %v1144, %v2008
  %v2073 = vmul.f32 %v1145, %v2009
  %v2074 = vmul.f32 %v1146, %v2010
  %v2075 = vmul.f32 %v1147, %v2011
  %v2076 = vmul.f32 %v1148, %v2012
  %v2077 = vmul.f32 %v1149, %v2013
  %v2078 = vmul.f32 %v1150, %v2014
  %v2079 = vmul.f32 %v1151, %v2015
  %v2080 = vmul.f32 %v1152, %v2016
  %v2081 = vmul.f32 %v1153, %v2017
  %v2082 = vmul.f32 %v1154, %v2018
  %v2083 = vmul.f32 %v1155, %v2019
  %v2084 = vmul.f32 %v1156, %v2020
  %v2085 = vmul.f32 %v1157, %v2021
  %v2086 = vmul.f32 %v1158, %v2022
  %v2087 = vmul.f32 %v1159, %v2023
  %v2088 = vmul.f32 %v1160, %v2024
  %v2089 = vmul.f32 %v1161, %v2025
  %v2090 = vmul.f32 %v1162, %v2026
  %v2091 = vmul.f32 %v1163, %v2027
  %v2092 = vmul.f32 %v1164, %v2028
  %v2093 = vmul.f32 %v1165, %v2029
  %v2094 = vmul.f32 %v1166, %v2030
  %v2095 = vmul.f32 %v1167, %v2031
  %v2096 = vmul.f32 %v1168, %v2032
  %v2097 = vmul.f32 %v1169, %v2033
  %v2098 = vmul.f32 %v1170, %v2034
  %v2099 = vmul.f32 %v1171, %v2035
  %v2100 = vmul.f32 %v1172, %v2036
  %v2101 = vmul.f32 %v1173, %v2037
  %v2102 = vmul.f32 %v1174, %v2038
  %v2103 = vsub.f32 %v2039, %v2071
  %v2104 = vsub.f32 %v2040, %v2072
  %v2105 = vsub.f32 %v2041, %v2073
  %v2106 = vsub.f32 %v2042, %v2074
  %v2107 = vsub.f32 %v2043, %v2075
  %v2108 = vsub.f32 %v2044, %v2076
  %v2109 = vsub.f32 %v2045, %v2077
  %v2110 = vsub.f32 %v2046, %v2078
  %v2111 = vsub.f32 %v2047, %v2079
  %v2112 = vsub.f32 %v2048, %v2080
  %v2113 = vsub.f32 %v2049, %v2081
  %v2114 = vsub.f32 %v2050, %v2082
  %v2115 = vsub.f32 %v2051, %v2083
  %v2116 = vsub.f32 %v2052, %v2084
  %v2117 = vsub.f32 %v2053, %v2085
  %v2118 = vsub.f32 %v2054, %v2086
  %v2119 = vsub.f32 %v2055, %v2087
  %v2120 = vsub.f32 %v2056, %v2088
  %v2121 = vsub.f32 %v2057, %v2089
  %v2122 = vsub.f32 %v2058, %v2090
  %v2123 = vsub.f32 %v2059, %v2091
  %v2124 = vsub.f32 %v2060, %v2092
  %v2125 = vsub.f32 %v2061, %v2093
  %v2126 = vsub.f32 %v2062, %v2094
  %v2127 = vsub.f32 %v2063, %v2095
  %v2128 = vsub.f32 %v2064, %v2096
  %v2129 = vsub.f32 %v2065, %v2097
  %v2130 = vsub.f32 %v2066, %v2098
  %v2131 = vsub.f32 %v2067, %v2099
  %v2132 = vsub.f32 %v2068, %v2100
  %v2133 = vsub.f32 %v2069, %v2101
  %v2134 = vsub.f32 %v2070, %v2102
  %2136 = vset.pattern.permute.xlu0 0
  %2137 = vperm.xlu0 %2136, %v2007
  %v2138 = vpop.permute.xlu0 %2137
  %2141 = vset.pattern.permute.xlu0 0
  %2142 = vperm.xlu0 %2141, %v2008
  %v2143 = vpop.permute.xlu0 %2142
  %2146 = vset.pattern.permute.xlu0 0
  %2147 = vperm.xlu0 %2146, %v2009
  %v2148 = vpop.permute.xlu0 %2147
  %2151 = vset.pattern.permute.xlu0 0
  %2152 = vperm.xlu0 %2151, %v2010
  %v2153 = vpop.permute.xlu0 %2152
  %2156 = vset.pattern.permute.xlu0 0
  %2157 = vperm.xlu0 %2156, %v2011
  %v2158 = vpop.permute.xlu0 %2157
  %2161 = vset.pattern.permute.xlu0 0
  %2162 = vperm.xlu0 %2161, %v2012
  %v2163 = vpop.permute.xlu0 %2162
  %2166 = vset.pattern.permute.xlu0 0
  %2167 = vperm.xlu0 %2166, %v2013
  %v2168 = vpop.permute.xlu0 %2167
  %2171 = vset.pattern.permute.xlu0 0
  %2172 = vperm.xlu0 %2171, %v2014
  %v2173 = vpop.permute.xlu0 %2172
  %2176 = vset.pattern.permute.xlu0 0
  %2177 = vperm.xlu0 %2176, %v2015
  %v2178 = vpop.permute.xlu0 %2177
  %2181 = vset.pattern.permute.xlu0 0
  %2182 = vperm.xlu0 %2181, %v2016
  %v2183 = vpop.permute.xlu0 %2182
  %2186 = vset.pattern.permute.xlu0 0
  %2187 = vperm.xlu0 %2186, %v2017
  %v2188 = vpop.permute.xlu0 %2187
  %2191 = vset.pattern.permute.xlu0 0
  %2192 = vperm.xlu0 %2191, %v2018
  %v2193 = vpop.permute.xlu0 %2192
  %2196 = vset.pattern.permute.xlu0 0
  %2197 = vperm.xlu0 %2196, %v2019
  %v2198 = vpop.permute.xlu0 %2197
  %2201 = vset.pattern.permute.xlu0 0
  %2202 = vperm.xlu0 %2201, %v2020
  %v2203 = vpop.permute.xlu0 %2202
  %2206 = vset.pattern.permute.xlu0 0
  %2207 = vperm.xlu0 %2206, %v2021
  %v2208 = vpop.permute.xlu0 %2207
  %2211 = vset.pattern.permute.xlu0 0
  %2212 = vperm.xlu0 %2211, %v2022
  %v2213 = vpop.permute.xlu0 %2212
  %2216 = vset.pattern.permute.xlu0 0
  %2217 = vperm.xlu0 %2216, %v2023
  %v2218 = vpop.permute.xlu0 %2217
  %2221 = vset.pattern.permute.xlu0 0
  %2222 = vperm.xlu0 %2221, %v2024
  %v2223 = vpop.permute.xlu0 %2222
  %2226 = vset.pattern.permute.xlu0 0
  %2227 = vperm.xlu0 %2226, %v2025
  %v2228 = vpop.permute.xlu0 %2227
  %2231 = vset.pattern.permute.xlu0 0
  %2232 = vperm.xlu0 %2231, %v2026
  %v2233 = vpop.permute.xlu0 %2232
  %2236 = vset.pattern.permute.xlu0 0
  %2237 = vperm.xlu0 %2236, %v2027
  %v2238 = vpop.permute.xlu0 %2237
  %2241 = vset.pattern.permute.xlu0 0
  %2242 = vperm.xlu0 %2241, %v2028
  %v2243 = vpop.permute.xlu0 %2242
  %2246 = vset.pattern.permute.xlu0 0
  %2247 = vperm.xlu0 %2246, %v2029
  %v2248 = vpop.permute.xlu0 %2247
  %2251 = vset.pattern.permute.xlu0 0
  %2252 = vperm.xlu0 %2251, %v2030
  %v2253 = vpop.permute.xlu0 %2252
  %2256 = vset.pattern.permute.xlu0 0
  %2257 = vperm.xlu0 %2256, %v2031
  %v2258 = vpop.permute.xlu0 %2257
  %2261 = vset.pattern.permute.xlu0 0
  %2262 = vperm.xlu0 %2261, %v2032
  %v2263 = vpop.permute.xlu0 %2262
  %2266 = vset.pattern.permute.xlu0 0
  %2267 = vperm.xlu0 %2266, %v2033
  %v2268 = vpop.permute.xlu0 %2267
  %2271 = vset.pattern.permute.xlu0 0
  %2272 = vperm.xlu0 %2271, %v2034
  %v2273 = vpop.permute.xlu0 %2272
  %2276 = vset.pattern.permute.xlu0 0
  %2277 = vperm.xlu0 %2276, %v2035
  %v2278 = vpop.permute.xlu0 %2277
  %2281 = vset.pattern.permute.xlu0 0
  %2282 = vperm.xlu0 %2281, %v2036
  %v2283 = vpop.permute.xlu0 %2282
  %2286 = vset.pattern.permute.xlu0 0
  %2287 = vperm.xlu0 %2286, %v2037
  %v2288 = vpop.permute.xlu0 %2287
  %2291 = vset.pattern.permute.xlu0 0
  %2292 = vperm.xlu0 %2291, %v2038
  %v2293 = vpop.permute.xlu0 %2292
  %v2295 = vmul.f32 %v1175, %v2138
  %v2296 = vmul.f32 %v1176, %v2138
  %v2297 = vmul.f32 %v1177, %v2143
  %v2298 = vmul.f32 %v1178, %v2143
  %v2299 = vmul.f32 %v1179, %v2148
  %v2300 = vmul.f32 %v1180, %v2148
  %v2301 = vmul.f32 %v1181, %v2153
  %v2302 = vmul.f32 %v1182, %v2153
  %v2303 = vmul.f32 %v1183, %v2158
  %v2304 = vmul.f32 %v1184, %v2158
  %v2305 = vmul.f32 %v1185, %v2163
  %v2306 = vmul.f32 %v1186, %v2163
  %v2307 = vmul.f32 %v1187, %v2168
  %v2308 = vmul.f32 %v1188, %v2168
  %v2309 = vmul.f32 %v1189, %v2173
  %v2310 = vmul.f32 %v1190, %v2173
  %v2311 = vmul.f32 %v1191, %v2178
  %v2312 = vmul.f32 %v1192, %v2178
  %v2313 = vmul.f32 %v1193, %v2183
  %v2314 = vmul.f32 %v1194, %v2183
  %v2315 = vmul.f32 %v1195, %v2188
  %v2316 = vmul.f32 %v1196, %v2188
  %v2317 = vmul.f32 %v1197, %v2193
  %v2318 = vmul.f32 %v1198, %v2193
  %v2319 = vmul.f32 %v1199, %v2198
  %v2320 = vmul.f32 %v1200, %v2198
  %v2321 = vmul.f32 %v1201, %v2203
  %v2322 = vmul.f32 %v1202, %v2203
  %v2323 = vmul.f32 %v1203, %v2208
  %v2324 = vmul.f32 %v1204, %v2208
  %v2325 = vmul.f32 %v1205, %v2213
  %v2326 = vmul.f32 %v1206, %v2213
  %v2327 = vmul.f32 %v1207, %v2218
  %v2328 = vmul.f32 %v1208, %v2218
  %v2329 = vmul.f32 %v1209, %v2223
  %v2330 = vmul.f32 %v1210, %v2223
  %v2331 = vmul.f32 %v1211, %v2228
  %v2332 = vmul.f32 %v1212, %v2228
  %v2333 = vmul.f32 %v1213, %v2233
  %v2334 = vmul.f32 %v1214, %v2233
  %v2335 = vmul.f32 %v1215, %v2238
  %v2336 = vmul.f32 %v1216, %v2238
  %v2337 = vmul.f32 %v1217, %v2243
  %v2338 = vmul.f32 %v1218, %v2243
  %v2339 = vmul.f32 %v1219, %v2248
  %v2340 = vmul.f32 %v1220, %v2248
  %v2341 = vmul.f32 %v1221, %v2253
  %v2342 = vmul.f32 %v1222, %v2253
  %v2343 = vmul.f32 %v1223, %v2258
  %v2344 = vmul.f32 %v1224, %v2258
  %v2345 = vmul.f32 %v1225, %v2263
  %v2346 = vmul.f32 %v1226, %v2263
  %v2347 = vmul.f32 %v1227, %v2268
  %v2348 = vmul.f32 %v1228, %v2268
  %v2349 = vmul.f32 %v1229, %v2273
  %v2350 = vmul.f32 %v1230, %v2273
  %v2351 = vmul.f32 %v1231, %v2278
  %v2352 = vmul.f32 %v1232, %v2278
  %v2353 = vmul.f32 %v1233, %v2283
  %v2354 = vmul.f32 %v1234, %v2283
  %v2355 = vmul.f32 %v1235, %v2288
  %v2356 = vmul.f32 %v1236, %v2288
  %v2357 = vmul.f32 %v1237, %v2293
  %v2358 = vmul.f32 %v1238, %v2293
  %2360 = vset.pattern.permute.xlu0 0
  %2361 = vperm.xlu0 %2360, %v2103
  %v2362 = vpop.permute.xlu0 %2361
  %2365 = vset.pattern.permute.xlu0 0
  %2366 = vperm.xlu0 %2365, %v2104
  %v2367 = vpop.permute.xlu0 %2366
  %2370 = vset.pattern.permute.xlu0 0
  %2371 = vperm.xlu0 %2370, %v2105
  %v2372 = vpop.permute.xlu0 %2371
  %2375 = vset.pattern.permute.xlu0 0
  %2376 = vperm.xlu0 %2375, %v2106
  %v2377 = vpop.permute.xlu0 %2376
  %2380 = vset.pattern.permute.xlu0 0
  %2381 = vperm.xlu0 %2380, %v2107
  %v2382 = vpop.permute.xlu0 %2381
  %2385 = vset.pattern.permute.xlu0 0
  %2386 = vperm.xlu0 %2385, %v2108
  %v2387 = vpop.permute.xlu0 %2386
  %2390 = vset.pattern.permute.xlu0 0
  %2391 = vperm.xlu0 %2390, %v2109
  %v2392 = vpop.permute.xlu0 %2391
  %2395 = vset.pattern.permute.xlu0 0
  %2396 = vperm.xlu0 %2395, %v2110
  %v2397 = vpop.permute.xlu0 %2396
  %2400 = vset.pattern.permute.xlu0 0
  %2401 = vperm.xlu0 %2400, %v2111
  %v2402 = vpop.permute.xlu0 %2401
  %2405 = vset.pattern.permute.xlu0 0
  %2406 = vperm.xlu0 %2405, %v2112
  %v2407 = vpop.permute.xlu0 %2406
  %2410 = vset.pattern.permute.xlu0 0
  %2411 = vperm.xlu0 %2410, %v2113
  %v2412 = vpop.permute.xlu0 %2411
  %2415 = vset.pattern.permute.xlu0 0
  %2416 = vperm.xlu0 %2415, %v2114
  %v2417 = vpop.permute.xlu0 %2416
  %2420 = vset.pattern.permute.xlu0 0
  %2421 = vperm.xlu0 %2420, %v2115
  %v2422 = vpop.permute.xlu0 %2421
  %2425 = vset.pattern.permute.xlu0 0
  %2426 = vperm.xlu0 %2425, %v2116
  %v2427 = vpop.permute.xlu0 %2426
  %2430 = vset.pattern.permute.xlu0 0
  %2431 = vperm.xlu0 %2430, %v2117
  %v2432 = vpop.permute.xlu0 %2431
  %2435 = vset.pattern.permute.xlu0 0
  %2436 = vperm.xlu0 %2435, %v2118
  %v2437 = vpop.permute.xlu0 %2436
  %2440 = vset.pattern.permute.xlu0 0
  %2441 = vperm.xlu0 %2440, %v2119
  %v2442 = vpop.permute.xlu0 %2441
  %2445 = vset.pattern.permute.xlu0 0
  %2446 = vperm.xlu0 %2445, %v2120
  %v2447 = vpop.permute.xlu0 %2446
  %2450 = vset.pattern.permute.xlu0 0
  %2451 = vperm.xlu0 %2450, %v2121
  %v2452 = vpop.permute.xlu0 %2451
  %2455 = vset.pattern.permute.xlu0 0
  %2456 = vperm.xlu0 %2455, %v2122
  %v2457 = vpop.permute.xlu0 %2456
  %2460 = vset.pattern.permute.xlu0 0
  %2461 = vperm.xlu0 %2460, %v2123
  %v2462 = vpop.permute.xlu0 %2461
  %2465 = vset.pattern.permute.xlu0 0
  %2466 = vperm.xlu0 %2465, %v2124
  %v2467 = vpop.permute.xlu0 %2466
  %2470 = vset.pattern.permute.xlu0 0
  %2471 = vperm.xlu0 %2470, %v2125
  %v2472 = vpop.permute.xlu0 %2471
  %2475 = vset.pattern.permute.xlu0 0
  %2476 = vperm.xlu0 %2475, %v2126
  %v2477 = vpop.permute.xlu0 %2476
  %2480 = vset.pattern.permute.xlu0 0
  %2481 = vperm.xlu0 %2480, %v2127
  %v2482 = vpop.permute.xlu0 %2481
  %2485 = vset.pattern.permute.xlu0 0
  %2486 = vperm.xlu0 %2485, %v2128
  %v2487 = vpop.permute.xlu0 %2486
  %2490 = vset.pattern.permute.xlu0 0
  %2491 = vperm.xlu0 %2490, %v2129
  %v2492 = vpop.permute.xlu0 %2491
  %2495 = vset.pattern.permute.xlu0 0
  %2496 = vperm.xlu0 %2495, %v2130
  %v2497 = vpop.permute.xlu0 %2496
  %2500 = vset.pattern.permute.xlu0 0
  %2501 = vperm.xlu0 %2500, %v2131
  %v2502 = vpop.permute.xlu0 %2501
  %2505 = vset.pattern.permute.xlu0 0
  %2506 = vperm.xlu0 %2505, %v2132
  %v2507 = vpop.permute.xlu0 %2506
  %2510 = vset.pattern.permute.xlu0 0
  %2511 = vperm.xlu0 %2510, %v2133
  %v2512 = vpop.permute.xlu0 %2511
  %2515 = vset.pattern.permute.xlu0 0
  %2516 = vperm.xlu0 %2515, %v2134
  %v2517 = vpop.permute.xlu0 %2516
  %v2519 = vadd.f32 %v2295, %v2362
  %v2520 = vadd.f32 %v2296, %v2362
  %v2521 = vadd.f32 %v2297, %v2367
  %v2522 = vadd.f32 %v2298, %v2367
  %v2523 = vadd.f32 %v2299, %v2372
  %v2524 = vadd.f32 %v2300, %v2372
  %v2525 = vadd.f32 %v2301, %v2377
  %v2526 = vadd.f32 %v2302, %v2377
  %v2527 = vadd.f32 %v2303, %v2382
  %v2528 = vadd.f32 %v2304, %v2382
  %v2529 = vadd.f32 %v2305, %v2387
  %v2530 = vadd.f32 %v2306, %v2387
  %v2531 = vadd.f32 %v2307, %v2392
  %v2532 = vadd.f32 %v2308, %v2392
  %v2533 = vadd.f32 %v2309, %v2397
  %v2534 = vadd.f32 %v2310, %v2397
  %v2535 = vadd.f32 %v2311, %v2402
  %v2536 = vadd.f32 %v2312, %v2402
  %v2537 = vadd.f32 %v2313, %v2407
  %v2538 = vadd.f32 %v2314, %v2407
  %v2539 = vadd.f32 %v2315, %v2412
  %v2540 = vadd.f32 %v2316, %v2412
  %v2541 = vadd.f32 %v2317, %v2417
  %v2542 = vadd.f32 %v2318, %v2417
  %v2543 = vadd.f32 %v2319, %v2422
  %v2544 = vadd.f32 %v2320, %v2422
  %v2545 = vadd.f32 %v2321, %v2427
  %v2546 = vadd.f32 %v2322, %v2427
  %v2547 = vadd.f32 %v2323, %v2432
  %v2548 = vadd.f32 %v2324, %v2432
  %v2549 = vadd.f32 %v2325, %v2437
  %v2550 = vadd.f32 %v2326, %v2437
  %v2551 = vadd.f32 %v2327, %v2442
  %v2552 = vadd.f32 %v2328, %v2442
  %v2553 = vadd.f32 %v2329, %v2447
  %v2554 = vadd.f32 %v2330, %v2447
  %v2555 = vadd.f32 %v2331, %v2452
  %v2556 = vadd.f32 %v2332, %v2452
  %v2557 = vadd.f32 %v2333, %v2457
  %v2558 = vadd.f32 %v2334, %v2457
  %v2559 = vadd.f32 %v2335, %v2462
  %v2560 = vadd.f32 %v2336, %v2462
  %v2561 = vadd.f32 %v2337, %v2467
  %v2562 = vadd.f32 %v2338, %v2467
  %v2563 = vadd.f32 %v2339, %v2472
  %v2564 = vadd.f32 %v2340, %v2472
  %v2565 = vadd.f32 %v2341, %v2477
  %v2566 = vadd.f32 %v2342, %v2477
  %v2567 = vadd.f32 %v2343, %v2482
  %v2568 = vadd.f32 %v2344, %v2482
  %v2569 = vadd.f32 %v2345, %v2487
  %v2570 = vadd.f32 %v2346, %v2487
  %v2571 = vadd.f32 %v2347, %v2492
  %v2572 = vadd.f32 %v2348, %v2492
  %v2573 = vadd.f32 %v2349, %v2497
  %v2574 = vadd.f32 %v2350, %v2497
  %v2575 = vadd.f32 %v2351, %v2502
  %v2576 = vadd.f32 %v2352, %v2502
  %v2577 = vadd.f32 %v2353, %v2507
  %v2578 = vadd.f32 %v2354, %v2507
  %v2579 = vadd.f32 %v2355, %v2512
  %v2580 = vadd.f32 %v2356, %v2512
  %v2581 = vadd.f32 %v2357, %v2517
  %v2582 = vadd.f32 %v2358, %v2517
  %2583 = vst [vmem:[%s4] sm:$0xff] %v2519
  %2584 = vst.msk [vmem:[%s4 + $0x8] sm:$0xff] %vm420, %v2520
  %2585 = vst [vmem:[%s4 + $0x10] sm:$0xff] %v2521
  %2586 = vst.msk [vmem:[%s4 + $0x18] sm:$0xff] %vm420, %v2522
  %2587 = vst [vmem:[%s4 + $0x20] sm:$0xff] %v2523
  %2588 = vst.msk [vmem:[%s4 + $0x28] sm:$0xff] %vm420, %v2524
  %2589 = vst [vmem:[%s4 + $0x30] sm:$0xff] %v2525
  %2590 = vst.msk [vmem:[%s4 + $0x38] sm:$0xff] %vm420, %v2526
  %2591 = vst [vmem:[%s4 + $0x40] sm:$0xff] %v2527
  %2592 = vst.msk [vmem:[%s4 + $0x48] sm:$0xff] %vm420, %v2528
  %2593 = vst [vmem:[%s4 + $0x50] sm:$0xff] %v2529
  %2594 = vst.msk [vmem:[%s4 + $0x58] sm:$0xff] %vm420, %v2530
  %2595 = vst [vmem:[%s4 + $0x60] sm:$0xff] %v2531
  %2596 = vst.msk [vmem:[%s4 + $0x68] sm:$0xff] %vm420, %v2532
  %2597 = vst [vmem:[%s4 + $0x70] sm:$0xff] %v2533
  %2598 = vst.msk [vmem:[%s4 + $0x78] sm:$0xff] %vm420, %v2534
  %2599 = vst [vmem:[%s4 + $0x80] sm:$0xff] %v2535
  %2600 = vst.msk [vmem:[%s4 + $0x88] sm:$0xff] %vm420, %v2536
  %2601 = vst [vmem:[%s4 + $0x90] sm:$0xff] %v2537
  %2602 = vst.msk [vmem:[%s4 + $0x98] sm:$0xff] %vm420, %v2538
  %2603 = vst [vmem:[%s4 + $0xa0] sm:$0xff] %v2539
  %2604 = vst.msk [vmem:[%s4 + $0xa8] sm:$0xff] %vm420, %v2540
  %2605 = vst [vmem:[%s4 + $0xb0] sm:$0xff] %v2541
  %2606 = vst.msk [vmem:[%s4 + $0xb8] sm:$0xff] %vm420, %v2542
  %2607 = vst [vmem:[%s4 + $0xc0] sm:$0xff] %v2543
  %2608 = vst.msk [vmem:[%s4 + $0xc8] sm:$0xff] %vm420, %v2544
  %2609 = vst [vmem:[%s4 + $0xd0] sm:$0xff] %v2545
  %2610 = vst.msk [vmem:[%s4 + $0xd8] sm:$0xff] %vm420, %v2546
  %2611 = vst [vmem:[%s4 + $0xe0] sm:$0xff] %v2547
  %2612 = vst.msk [vmem:[%s4 + $0xe8] sm:$0xff] %vm420, %v2548
  %2613 = vst [vmem:[%s4 + $0xf0] sm:$0xff] %v2549
  %2614 = vst.msk [vmem:[%s4 + $0xf8] sm:$0xff] %vm420, %v2550
  %2615 = vst [vmem:[%s4 + $0x100] sm:$0xff] %v2551
  %2616 = vst.msk [vmem:[%s4 + $0x108] sm:$0xff] %vm420, %v2552
  %2617 = vst [vmem:[%s4 + $0x110] sm:$0xff] %v2553
  %2618 = vst.msk [vmem:[%s4 + $0x118] sm:$0xff] %vm420, %v2554
  %2619 = vst [vmem:[%s4 + $0x120] sm:$0xff] %v2555
  %2620 = vst.msk [vmem:[%s4 + $0x128] sm:$0xff] %vm420, %v2556
  %2621 = vst [vmem:[%s4 + $0x130] sm:$0xff] %v2557
  %2622 = vst.msk [vmem:[%s4 + $0x138] sm:$0xff] %vm420, %v2558
  %2623 = vst [vmem:[%s4 + $0x140] sm:$0xff] %v2559
  %2624 = vst.msk [vmem:[%s4 + $0x148] sm:$0xff] %vm420, %v2560
  %2625 = vst [vmem:[%s4 + $0x150] sm:$0xff] %v2561
  %2626 = vst.msk [vmem:[%s4 + $0x158] sm:$0xff] %vm420, %v2562
  %2627 = vst [vmem:[%s4 + $0x160] sm:$0xff] %v2563
  %2628 = vst.msk [vmem:[%s4 + $0x168] sm:$0xff] %vm420, %v2564
  %2629 = vst [vmem:[%s4 + $0x170] sm:$0xff] %v2565
  %2630 = vst.msk [vmem:[%s4 + $0x178] sm:$0xff] %vm420, %v2566
  %2631 = vst [vmem:[%s4 + $0x180] sm:$0xff] %v2567
  %2632 = vst.msk [vmem:[%s4 + $0x188] sm:$0xff] %vm420, %v2568
  %2633 = vst [vmem:[%s4 + $0x190] sm:$0xff] %v2569
  %2634 = vst.msk [vmem:[%s4 + $0x198] sm:$0xff] %vm420, %v2570
  %2635 = vst [vmem:[%s4 + $0x1a0] sm:$0xff] %v2571
  %2636 = vst.msk [vmem:[%s4 + $0x1a8] sm:$0xff] %vm420, %v2572
  %2637 = vst [vmem:[%s4 + $0x1b0] sm:$0xff] %v2573
  %2638 = vst.msk [vmem:[%s4 + $0x1b8] sm:$0xff] %vm420, %v2574
  %2639 = vst [vmem:[%s4 + $0x1c0] sm:$0xff] %v2575
  %2640 = vst.msk [vmem:[%s4 + $0x1c8] sm:$0xff] %vm420, %v2576
  %2641 = vst [vmem:[%s4 + $0x1d0] sm:$0xff] %v2577
  %2642 = vst.msk [vmem:[%s4 + $0x1d8] sm:$0xff] %vm420, %v2578
  %2643 = vst [vmem:[%s4 + $0x1e0] sm:$0xff] %v2579
  %2644 = vst.msk [vmem:[%s4 + $0x1e8] sm:$0xff] %vm420, %v2580
  %2645 = vst [vmem:[%s4 + $0x1f0] sm:$0xff] %v2581
  %2646 = vst.msk [vmem:[%s4 + $0x1f8] sm:$0xff] %vm420, %v2582
  %v2647 = vld [vmem:[%s918] sm:$0xff]
  %v2648 = vld [vmem:[%s918 + $0x8] sm:$0xff]
  %v2649 = vld [vmem:[%s918 + $0x10] sm:$0xff]
  %v2650 = vld [vmem:[%s918 + $0x18] sm:$0xff]
  %v2651 = vld [vmem:[%s918 + $0x20] sm:$0xff]
  %v2652 = vld [vmem:[%s918 + $0x28] sm:$0xff]
  %v2653 = vld [vmem:[%s918 + $0x30] sm:$0xff]
  %v2654 = vld [vmem:[%s918 + $0x38] sm:$0xff]
  %v2655 = vld [vmem:[%s918 + $0x40] sm:$0xff]
  %v2656 = vld [vmem:[%s918 + $0x48] sm:$0xff]
  %v2657 = vld [vmem:[%s918 + $0x50] sm:$0xff]
  %v2658 = vld [vmem:[%s918 + $0x58] sm:$0xff]
  %v2659 = vld [vmem:[%s918 + $0x60] sm:$0xff]
  %v2660 = vld [vmem:[%s918 + $0x68] sm:$0xff]
  %v2661 = vld [vmem:[%s918 + $0x70] sm:$0xff]
  %v2662 = vld [vmem:[%s918 + $0x78] sm:$0xff]
  %v2663 = vld [vmem:[%s918 + $0x80] sm:$0xff]
  %v2664 = vld [vmem:[%s918 + $0x88] sm:$0xff]
  %v2665 = vld [vmem:[%s918 + $0x90] sm:$0xff]
  %v2666 = vld [vmem:[%s918 + $0x98] sm:$0xff]
  %v2667 = vld [vmem:[%s918 + $0xa0] sm:$0xff]
  %v2668 = vld [vmem:[%s918 + $0xa8] sm:$0xff]
  %v2669 = vld [vmem:[%s918 + $0xb0] sm:$0xff]
  %v2670 = vld [vmem:[%s918 + $0xb8] sm:$0xff]
  %v2671 = vld [vmem:[%s918 + $0xc0] sm:$0xff]
  %v2672 = vld [vmem:[%s918 + $0xc8] sm:$0xff]
  %v2673 = vld [vmem:[%s918 + $0xd0] sm:$0xff]
  %v2674 = vld [vmem:[%s918 + $0xd8] sm:$0xff]
  %v2675 = vld [vmem:[%s918 + $0xe0] sm:$0xff]
  %v2676 = vld [vmem:[%s918 + $0xe8] sm:$0xff]
  %v2677 = vld [vmem:[%s918 + $0xf0] sm:$0xff]
  %v2678 = vld [vmem:[%s918 + $0xf8] sm:$0xff]
  %v2679 = vld [vmem:[%s918 + $0x100] sm:$0xff]
  %v2680 = vld [vmem:[%s918 + $0x108] sm:$0xff]
  %v2681 = vld [vmem:[%s918 + $0x110] sm:$0xff]
  %v2682 = vld [vmem:[%s918 + $0x118] sm:$0xff]
  %v2683 = vld [vmem:[%s918 + $0x120] sm:$0xff]
  %v2684 = vld [vmem:[%s918 + $0x128] sm:$0xff]
  %v2685 = vld [vmem:[%s918 + $0x130] sm:$0xff]
  %v2686 = vld [vmem:[%s918 + $0x138] sm:$0xff]
  %v2687 = vld [vmem:[%s918 + $0x140] sm:$0xff]
  %v2688 = vld [vmem:[%s918 + $0x148] sm:$0xff]
  %v2689 = vld [vmem:[%s918 + $0x150] sm:$0xff]
  %v2690 = vld [vmem:[%s918 + $0x158] sm:$0xff]
  %v2691 = vld [vmem:[%s918 + $0x160] sm:$0xff]
  %v2692 = vld [vmem:[%s918 + $0x168] sm:$0xff]
  %v2693 = vld [vmem:[%s918 + $0x170] sm:$0xff]
  %v2694 = vld [vmem:[%s918 + $0x178] sm:$0xff]
  %v2695 = vld [vmem:[%s918 + $0x180] sm:$0xff]
  %v2696 = vld [vmem:[%s918 + $0x188] sm:$0xff]
  %v2697 = vld [vmem:[%s918 + $0x190] sm:$0xff]
  %v2698 = vld [vmem:[%s918 + $0x198] sm:$0xff]
  %v2699 = vld [vmem:[%s918 + $0x1a0] sm:$0xff]
  %v2700 = vld [vmem:[%s918 + $0x1a8] sm:$0xff]
  %v2701 = vld [vmem:[%s918 + $0x1b0] sm:$0xff]
  %v2702 = vld [vmem:[%s918 + $0x1b8] sm:$0xff]
  %v2703 = vld [vmem:[%s918 + $0x1c0] sm:$0xff]
  %v2704 = vld [vmem:[%s918 + $0x1c8] sm:$0xff]
  %v2705 = vld [vmem:[%s918 + $0x1d0] sm:$0xff]
  %v2706 = vld [vmem:[%s918 + $0x1d8] sm:$0xff]
  %v2707 = vld [vmem:[%s918 + $0x1e0] sm:$0xff]
  %v2708 = vld [vmem:[%s918 + $0x1e8] sm:$0xff]
  %v2709 = vld [vmem:[%s918 + $0x1f0] sm:$0xff]
  %v2710 = vld [vmem:[%s918 + $0x1f8] sm:$0xff]
  %v2711 = vmul.f32 %v2647, %v2138
  %v2712 = vmul.f32 %v2648, %v2138
  %v2713 = vmul.f32 %v2649, %v2143
  %v2714 = vmul.f32 %v2650, %v2143
  %v2715 = vmul.f32 %v2651, %v2148
  %v2716 = vmul.f32 %v2652, %v2148
  %v2717 = vmul.f32 %v2653, %v2153
  %v2718 = vmul.f32 %v2654, %v2153
  %v2719 = vmul.f32 %v2655, %v2158
  %v2720 = vmul.f32 %v2656, %v2158
  %v2721 = vmul.f32 %v2657, %v2163
  %v2722 = vmul.f32 %v2658, %v2163
  %v2723 = vmul.f32 %v2659, %v2168
  %v2724 = vmul.f32 %v2660, %v2168
  %v2725 = vmul.f32 %v2661, %v2173
  %v2726 = vmul.f32 %v2662, %v2173
  %v2727 = vmul.f32 %v2663, %v2178
  %v2728 = vmul.f32 %v2664, %v2178
  %v2729 = vmul.f32 %v2665, %v2183
  %v2730 = vmul.f32 %v2666, %v2183
  %v2731 = vmul.f32 %v2667, %v2188
  %v2732 = vmul.f32 %v2668, %v2188
  %v2733 = vmul.f32 %v2669, %v2193
  %v2734 = vmul.f32 %v2670, %v2193
  %v2735 = vmul.f32 %v2671, %v2198
  %v2736 = vmul.f32 %v2672, %v2198
  %v2737 = vmul.f32 %v2673, %v2203
  %v2738 = vmul.f32 %v2674, %v2203
  %v2739 = vmul.f32 %v2675, %v2208
  %v2740 = vmul.f32 %v2676, %v2208
  %v2741 = vmul.f32 %v2677, %v2213
  %v2742 = vmul.f32 %v2678, %v2213
  %v2743 = vmul.f32 %v2679, %v2218
  %v2744 = vmul.f32 %v2680, %v2218
  %v2745 = vmul.f32 %v2681, %v2223
  %v2746 = vmul.f32 %v2682, %v2223
  %v2747 = vmul.f32 %v2683, %v2228
  %v2748 = vmul.f32 %v2684, %v2228
  %v2749 = vmul.f32 %v2685, %v2233
  %v2750 = vmul.f32 %v2686, %v2233
  %v2751 = vmul.f32 %v2687, %v2238
  %v2752 = vmul.f32 %v2688, %v2238
  %v2753 = vmul.f32 %v2689, %v2243
  %v2754 = vmul.f32 %v2690, %v2243
  %v2755 = vmul.f32 %v2691, %v2248
  %v2756 = vmul.f32 %v2692, %v2248
  %v2757 = vmul.f32 %v2693, %v2253
  %v2758 = vmul.f32 %v2694, %v2253
  %v2759 = vmul.f32 %v2695, %v2258
  %v2760 = vmul.f32 %v2696, %v2258
  %v2761 = vmul.f32 %v2697, %v2263
  %v2762 = vmul.f32 %v2698, %v2263
  %v2763 = vmul.f32 %v2699, %v2268
  %v2764 = vmul.f32 %v2700, %v2268
  %v2765 = vmul.f32 %v2701, %v2273
  %v2766 = vmul.f32 %v2702, %v2273
  %v2767 = vmul.f32 %v2703, %v2278
  %v2768 = vmul.f32 %v2704, %v2278
  %v2769 = vmul.f32 %v2705, %v2283
  %v2770 = vmul.f32 %v2706, %v2283
  %v2771 = vmul.f32 %v2707, %v2288
  %v2772 = vmul.f32 %v2708, %v2288
  %v2773 = vmul.f32 %v2709, %v2293
  %v2774 = vmul.f32 %v2710, %v2293
  %v2775 = vadd.f32 %v2711, %v2362
  %v2776 = vadd.f32 %v2712, %v2362
  %v2777 = vadd.f32 %v2713, %v2367
  %v2778 = vadd.f32 %v2714, %v2367
  %v2779 = vadd.f32 %v2715, %v2372
  %v2780 = vadd.f32 %v2716, %v2372
  %v2781 = vadd.f32 %v2717, %v2377
  %v2782 = vadd.f32 %v2718, %v2377
  %v2783 = vadd.f32 %v2719, %v2382
  %v2784 = vadd.f32 %v2720, %v2382
  %v2785 = vadd.f32 %v2721, %v2387
  %v2786 = vadd.f32 %v2722, %v2387
  %v2787 = vadd.f32 %v2723, %v2392
  %v2788 = vadd.f32 %v2724, %v2392
  %v2789 = vadd.f32 %v2725, %v2397
  %v2790 = vadd.f32 %v2726, %v2397
  %v2791 = vadd.f32 %v2727, %v2402
  %v2792 = vadd.f32 %v2728, %v2402
  %v2793 = vadd.f32 %v2729, %v2407
  %v2794 = vadd.f32 %v2730, %v2407
  %v2795 = vadd.f32 %v2731, %v2412
  %v2796 = vadd.f32 %v2732, %v2412
  %v2797 = vadd.f32 %v2733, %v2417
  %v2798 = vadd.f32 %v2734, %v2417
  %v2799 = vadd.f32 %v2735, %v2422
  %v2800 = vadd.f32 %v2736, %v2422
  %v2801 = vadd.f32 %v2737, %v2427
  %v2802 = vadd.f32 %v2738, %v2427
  %v2803 = vadd.f32 %v2739, %v2432
  %v2804 = vadd.f32 %v2740, %v2432
  %v2805 = vadd.f32 %v2741, %v2437
  %v2806 = vadd.f32 %v2742, %v2437
  %v2807 = vadd.f32 %v2743, %v2442
  %v2808 = vadd.f32 %v2744, %v2442
  %v2809 = vadd.f32 %v2745, %v2447
  %v2810 = vadd.f32 %v2746, %v2447
  %v2811 = vadd.f32 %v2747, %v2452
  %v2812 = vadd.f32 %v2748, %v2452
  %v2813 = vadd.f32 %v2749, %v2457
  %v2814 = vadd.f32 %v2750, %v2457
  %v2815 = vadd.f32 %v2751, %v2462
  %v2816 = vadd.f32 %v2752, %v2462
  %v2817 = vadd.f32 %v2753, %v2467
  %v2818 = vadd.f32 %v2754, %v2467
  %v2819 = vadd.f32 %v2755, %v2472
  %v2820 = vadd.f32 %v2756, %v2472
  %v2821 = vadd.f32 %v2757, %v2477
  %v2822 = vadd.f32 %v2758, %v2477
  %v2823 = vadd.f32 %v2759, %v2482
  %v2824 = vadd.f32 %v2760, %v2482
  %v2825 = vadd.f32 %v2761, %v2487
  %v2826 = vadd.f32 %v2762, %v2487
  %v2827 = vadd.f32 %v2763, %v2492
  %v2828 = vadd.f32 %v2764, %v2492
  %v2829 = vadd.f32 %v2765, %v2497
  %v2830 = vadd.f32 %v2766, %v2497
  %v2831 = vadd.f32 %v2767, %v2502
  %v2832 = vadd.f32 %v2768, %v2502
  %v2833 = vadd.f32 %v2769, %v2507
  %v2834 = vadd.f32 %v2770, %v2507
  %v2835 = vadd.f32 %v2771, %v2512
  %v2836 = vadd.f32 %v2772, %v2512
  %v2837 = vadd.f32 %v2773, %v2517
  %v2838 = vadd.f32 %v2774, %v2517
  %2839 = vst [vmem:[%s918] sm:$0xff] %v2775
  %2840 = vst.msk [vmem:[%s918 + $0x8] sm:$0xff] %vm420, %v2776
  %2841 = vst [vmem:[%s918 + $0x10] sm:$0xff] %v2777
  %2842 = vst.msk [vmem:[%s918 + $0x18] sm:$0xff] %vm420, %v2778
  %2843 = vst [vmem:[%s918 + $0x20] sm:$0xff] %v2779
  %2844 = vst.msk [vmem:[%s918 + $0x28] sm:$0xff] %vm420, %v2780
  %2845 = vst [vmem:[%s918 + $0x30] sm:$0xff] %v2781
  %2846 = vst.msk [vmem:[%s918 + $0x38] sm:$0xff] %vm420, %v2782
  %2847 = vst [vmem:[%s918 + $0x40] sm:$0xff] %v2783
  %2848 = vst.msk [vmem:[%s918 + $0x48] sm:$0xff] %vm420, %v2784
  %2849 = vst [vmem:[%s918 + $0x50] sm:$0xff] %v2785
  %2850 = vst.msk [vmem:[%s918 + $0x58] sm:$0xff] %vm420, %v2786
  %2851 = vst [vmem:[%s918 + $0x60] sm:$0xff] %v2787
  %2852 = vst.msk [vmem:[%s918 + $0x68] sm:$0xff] %vm420, %v2788
  %2853 = vst [vmem:[%s918 + $0x70] sm:$0xff] %v2789
  %2854 = vst.msk [vmem:[%s918 + $0x78] sm:$0xff] %vm420, %v2790
  %2855 = vst [vmem:[%s918 + $0x80] sm:$0xff] %v2791
  %2856 = vst.msk [vmem:[%s918 + $0x88] sm:$0xff] %vm420, %v2792
  %2857 = vst [vmem:[%s918 + $0x90] sm:$0xff] %v2793
  %2858 = vst.msk [vmem:[%s918 + $0x98] sm:$0xff] %vm420, %v2794
  %2859 = vst [vmem:[%s918 + $0xa0] sm:$0xff] %v2795
  %2860 = vst.msk [vmem:[%s918 + $0xa8] sm:$0xff] %vm420, %v2796
  %2861 = vst [vmem:[%s918 + $0xb0] sm:$0xff] %v2797
  %2862 = vst.msk [vmem:[%s918 + $0xb8] sm:$0xff] %vm420, %v2798
  %2863 = vst [vmem:[%s918 + $0xc0] sm:$0xff] %v2799
  %2864 = vst.msk [vmem:[%s918 + $0xc8] sm:$0xff] %vm420, %v2800
  %2865 = vst [vmem:[%s918 + $0xd0] sm:$0xff] %v2801
  %2866 = vst.msk [vmem:[%s918 + $0xd8] sm:$0xff] %vm420, %v2802
  %2867 = vst [vmem:[%s918 + $0xe0] sm:$0xff] %v2803
  %2868 = vst.msk [vmem:[%s918 + $0xe8] sm:$0xff] %vm420, %v2804
  %2869 = vst [vmem:[%s918 + $0xf0] sm:$0xff] %v2805
  %2870 = vst.msk [vmem:[%s918 + $0xf8] sm:$0xff] %vm420, %v2806
  %2871 = vst [vmem:[%s918 + $0x100] sm:$0xff] %v2807
  %2872 = vst.msk [vmem:[%s918 + $0x108] sm:$0xff] %vm420, %v2808
  %2873 = vst [vmem:[%s918 + $0x110] sm:$0xff] %v2809
  %2874 = vst.msk [vmem:[%s918 + $0x118] sm:$0xff] %vm420, %v2810
  %2875 = vst [vmem:[%s918 + $0x120] sm:$0xff] %v2811
  %2876 = vst.msk [vmem:[%s918 + $0x128] sm:$0xff] %vm420, %v2812
  %2877 = vst [vmem:[%s918 + $0x130] sm:$0xff] %v2813
  %2878 = vst.msk [vmem:[%s918 + $0x138] sm:$0xff] %vm420, %v2814
  %2879 = vst [vmem:[%s918 + $0x140] sm:$0xff] %v2815
  %2880 = vst.msk [vmem:[%s918 + $0x148] sm:$0xff] %vm420, %v2816
  %2881 = vst [vmem:[%s918 + $0x150] sm:$0xff] %v2817
  %2882 = vst.msk [vmem:[%s918 + $0x158] sm:$0xff] %vm420, %v2818
  %2883 = vst [vmem:[%s918 + $0x160] sm:$0xff] %v2819
  %2884 = vst.msk [vmem:[%s918 + $0x168] sm:$0xff] %vm420, %v2820
  %2885 = vst [vmem:[%s918 + $0x170] sm:$0xff] %v2821
  %2886 = vst.msk [vmem:[%s918 + $0x178] sm:$0xff] %vm420, %v2822
  %2887 = vst [vmem:[%s918 + $0x180] sm:$0xff] %v2823
  %2888 = vst.msk [vmem:[%s918 + $0x188] sm:$0xff] %vm420, %v2824
  %2889 = vst [vmem:[%s918 + $0x190] sm:$0xff] %v2825
  %2890 = vst.msk [vmem:[%s918 + $0x198] sm:$0xff] %vm420, %v2826
  %2891 = vst [vmem:[%s918 + $0x1a0] sm:$0xff] %v2827
  %2892 = vst.msk [vmem:[%s918 + $0x1a8] sm:$0xff] %vm420, %v2828
  %2893 = vst [vmem:[%s918 + $0x1b0] sm:$0xff] %v2829
  %2894 = vst.msk [vmem:[%s918 + $0x1b8] sm:$0xff] %vm420, %v2830
  %2895 = vst [vmem:[%s918 + $0x1c0] sm:$0xff] %v2831
  %2896 = vst.msk [vmem:[%s918 + $0x1c8] sm:$0xff] %vm420, %v2832
  %2897 = vst [vmem:[%s918 + $0x1d0] sm:$0xff] %v2833
  %2898 = vst.msk [vmem:[%s918 + $0x1d8] sm:$0xff] %vm420, %v2834
  %2899 = vst [vmem:[%s918 + $0x1e0] sm:$0xff] %v2835
  %2900 = vst.msk [vmem:[%s918 + $0x1e8] sm:$0xff] %vm420, %v2836
  %2901 = vst [vmem:[%s918 + $0x1f0] sm:$0xff] %v2837
  %2902 = vst.msk [vmem:[%s918 + $0x1f8] sm:$0xff] %vm420, %v2838
  // Predicated region
  $region18: #{conv1x1_batchnorm_forward.1} parent=0 // pred_check
    _
  $region19: #{conv1x1_batchnorm_forward.1} parent=0 // pred_check_branch
    %2904 = sbr.rel (0) target = $region21
  $region20: #{conv1x1_batchnorm_forward.1} parent=0 // pred_region
    _
  $region21: #{conv1x1_batchnorm_forward.1} parent=0 // pred_fallthru
    _
  // Predicated region
  $region22: #{conv1x1_batchnorm_forward.1} parent=0 // pred_check
    _
  $region23: #{conv1x1_batchnorm_forward.1} parent=0 // pred_check_branch
    %2906 = sbr.rel (0) target = $region25
  $region24: #{conv1x1_batchnorm_forward.1} parent=0 // pred_region
    _
  $region25: #{conv1x1_batchnorm_forward.1} parent=0 // pred_fallthru
    _

</llo_original>
